<compile_context>
chip_gen: v5e
topology: v5e:2x2
jax: 0.10.0
libtpu: 0.0.40
codegen_flags: <defaults>
</compile_context>

<pallas_src>
import functools

import jax
import jax.numpy as jnp
from jax.experimental import pallas as pl
from jax.experimental.pallas import tpu as pltpu

_C1 = 0.01 ** 2
_C2 = 0.03 ** 2

# ~1 MB per input block: near the HBM roofline, and 2 inputs x 2 pipeline
# buffers + output + ~10 live intermediate planes stays well under 32 MiB.
_TARGET_BLOCK_BYTES = 1 << 20
_VMEM_LIMIT_BYTES = 32 * 1024 * 1024


def _ssim_from_box_sums(sx, sy, sxx, syy, sxy):
    """Elementwise SSIM loss from 3x3 box *sums* of x, y, x^2, y^2, x*y."""
    inv9 = jnp.float32(1.0 / 9.0)
    mu_x = sx * inv9
    mu_y = sy * inv9
    sigma_x = sxx * inv9 - mu_x * mu_x
    sigma_y = syy * inv9 - mu_y * mu_y
    sigma_xy = sxy * inv9 - mu_x * mu_y
    ssim_n = (2.0 * mu_x * mu_y + _C1) * (2.0 * sigma_xy + _C2)
    ssim_d = (mu_x * mu_x + mu_y * mu_y + _C1) * (sigma_x + sigma_y + _C2)
    return jnp.clip((1.0 - ssim_n / ssim_d) * 0.5, 0.0, 1.0)


def _ssim_kernel_fused(x_ref, y_ref, out_ref):
    """Fused-pad kernel: (P, H, W) unpadded planes -> (P, H, W) loss map."""
    x = x_ref[...]
    y = y_ref[...]
    _, h, w = x_ref.shape

    def box3(q):
        # Separable 3x3 box sum with reflect(1) boundaries. Neighbours are
        # built explicitly, so there is no wrap-around to mask and no
        # dependence on rotate direction conventions.
        left = jnp.concatenate([q[:, :, 1:2], q[:, :, : w - 1]], axis=2)
        right = jnp.concatenate([q[:, :, 1:w], q[:, :, w - 2: w - 1]], axis=2)
        hs = q + left + right
        up = jnp.concatenate([hs[:, 1:2, :], hs[:, : h - 1, :]], axis=1)
        down = jnp.concatenate([hs[:, 1:h, :], hs[:, h - 2: h - 1, :]], axis=1)
        return hs + up + down

    out = _ssim_from_box_sums(
        box3(x), box3(y), box3(x * x), box3(y * y), box3(x * y)
    )
    out_ref[...] = out.astype(out_ref.dtype)


def _ssim_kernel_padded(xp_ref, yp_ref, out_ref):
    """Fallback kernel: (P, H+2, W+2) reflection-padded planes -> (P, H, W)."""
    xp = xp_ref[...]
    yp = yp_ref[...]
    _, h, w = out_ref.shape

    def box3(q):
        hs = q[:, :, 0:w] + q[:, :, 1: w + 1] + q[:, :, 2: w + 2]
        return hs[:, 0:h, :] + hs[:, 1: h + 1, :] + hs[:, 2: h + 2, :]

    out = _ssim_from_box_sums(
        box3(xp), box3(yp), box3(xp * xp), box3(yp * yp), box3(xp * yp)
    )
    out_ref[...] = out.astype(out_ref.dtype)


def _plan_blocks(n_planes, plane_bytes):
    p = max(1, min(n_planes, _TARGET_BLOCK_BYTES // max(plane_bytes, 1)))
    if n_planes >= 2:
        # Keep at least 2 grid steps so the "parallel" axis can shard across
        # the two TensorCores of a v7x chip.
        p = min(p, -(-n_planes // 2))
    grid = -(-n_planes // p)
    return int(p), int(grid)


def _compiler_params():
    return pltpu.CompilerParams(
        dimension_semantics=("parallel",),
        vmem_limit_bytes=_VMEM_LIMIT_BYTES,
    )


def _ssim_fused_call(x3, y3):
    n, h, w = x3.shape
    p, grid = _plan_blocks(n, h * w * 4)
    return pl.pallas_call(
        _ssim_kernel_fused,
        out_shape=jax.ShapeDtypeStruct((n, h, w), jnp.float32),
        grid_spec=pltpu.PrefetchScalarGridSpec(
            num_scalar_prefetch=0,
            grid=(grid,),
            in_specs=[
                pl.BlockSpec((p, h, w), lambda i: (i, 0, 0)),
                pl.BlockSpec((p, h, w), lambda i: (i, 0, 0)),
            ],
            out_specs=pl.BlockSpec((p, h, w), lambda i: (i, 0, 0)),
        ),
        compiler_params=_compiler_params(),
    )(x3, y3)


def _ssim_padded_call(x3, y3):
    n, h, w = x3.shape
    xp = jnp.pad(x3, ((0, 0), (1, 1), (1, 1)), mode="reflect")
    yp = jnp.pad(y3, ((0, 0), (1, 1), (1, 1)), mode="reflect")
    p, grid = _plan_blocks(n, (h + 2) * (w + 2) * 4)
    return pl.pallas_call(
        _ssim_kernel_padded,
        out_shape=jax.ShapeDtypeStruct((n, h, w), jnp.float32),
        grid_spec=pltpu.PrefetchScalarGridSpec(
            num_scalar_prefetch=0,
            grid=(grid,),
            in_specs=[
                pl.BlockSpec((p, h + 2, w + 2), lambda i: (i, 0, 0)),
                pl.BlockSpec((p, h + 2, w + 2), lambda i: (i, 0, 0)),
            ],
            out_specs=pl.BlockSpec((p, h, w), lambda i: (i, 0, 0)),
        ),
        compiler_params=_compiler_params(),
    )(xp, yp)


@functools.lru_cache(maxsize=None)
def _fused_path_supported(h, w):
    """One-time probe: does the fused (in-kernel reflection) path lower here?"""
    try:
        z = jnp.zeros((1, h, w), jnp.float32)
        jax.block_until_ready(_ssim_fused_call(z, z))
        return True
    except Exception:
        return False


def ssim_loss(x, y):
    """SSIM loss map; semantics identical to the PyTorch SSIM module.

    x, y: (B, C, H, W). Returns (B, C, H, W) float32 in [0, 1].
    """
    if x.ndim != 4 or x.shape != y.shape:
        raise ValueError("x and y must both be (B, C, H, W)")
    B, C, H, W = x.shape
    if H < 2 or W < 2:
        raise ValueError("reflection padding needs H >= 2 and W >= 2")
    # Note: planes much larger than ~2 MB each would additionally need
    # intra-plane (row-block) tiling on top of the plane fusion done here.

    n = B * C
    x3 = x.reshape(n, H, W).astype(jnp.float32)
    y3 = y.reshape(n, H, W).astype(jnp.float32)

    if _fused_path_supported(H, W):
        try:
            out = _ssim_fused_call(x3, y3)
        except Exception:  # extra safety net on the eager path
            out = _ssim_padded_call(x3, y3)
    else:
        out = _ssim_padded_call(x3, y3)
    return out.reshape(B, C, H, W)


if __name__ == "__main__":
    key = jax.random.PRNGKey(0)
    kx, ky = jax.random.split(key)
    B, C, H, W = 2, 4, 16, 16
    x = jax.random.uniform(kx, (B, C, H, W), dtype=jnp.float32)
    y = jax.random.uniform(ky, (B, C, H, W), dtype=jnp.float32)

    out = ssim_loss(x, y)
    out = jax.block_until_ready(out)

    assert out.shape == (B, C, H, W)
    assert out.dtype == jnp.float32
    assert bool(jnp.all(jnp.isfinite(out)))
    assert bool(jnp.all((out >= 0.0) & (out <= 1.0)))
    print("KERNEL_OK")
</pallas_src>

<mosaic_0001>
module attributes {stable_mosaic.version = 11 : i64} {
  func.func @_ssim_kernel_fused(%arg0: i32, %arg1: memref<1x16x16xf32, #tpu.memory_space<vmem>>, %arg2: memref<1x16x16xf32, #tpu.memory_space<vmem>>, %arg3: memref<1x16x16xf32, #tpu.memory_space<vmem>>) attributes {dimension_semantics = [#tpu.dimension_semantics<parallel>], iteration_bounds = array<i64: 1>, scalar_prefetch = 0 : i64, scratch_operands = 0 : i64, tpu.core_type = #tpu.core_type<tc>, window_params = [{transform_indices = @transform_0, window_bounds = array<i64: 1, 16, 16>}, {transform_indices = @transform_1, window_bounds = array<i64: 1, 16, 16>}, {transform_indices = @transform_2, window_bounds = array<i64: 1, 16, 16>}]} {
    %c0 = arith.constant 0 : index
    %c0_0 = arith.constant 0 : index
    %c0_1 = arith.constant 0 : index
    %0 = vector.load %arg1[%c0, %c0_0, %c0_1] : memref<1x16x16xf32, #tpu.memory_space<vmem>>, vector<1x16x16xf32>
    %c0_2 = arith.constant 0 : index
    %c0_3 = arith.constant 0 : index
    %c0_4 = arith.constant 0 : index
    %1 = vector.load %arg2[%c0_2, %c0_3, %c0_4] : memref<1x16x16xf32, #tpu.memory_space<vmem>>, vector<1x16x16xf32>
    %2 = vector.extract_strided_slice %0 {offsets = [0, 0, 1], sizes = [1, 16, 1], strides = [1, 1, 1]} : vector<1x16x16xf32> to vector<1x16x1xf32>
    %3 = vector.extract_strided_slice %0 {offsets = [0, 0, 0], sizes = [1, 16, 15], strides = [1, 1, 1]} : vector<1x16x16xf32> to vector<1x16x15xf32>
    %4 = tpu.concatenate %2, %3 in 2 : vector<1x16x1xf32>, vector<1x16x15xf32> -> vector<1x16x16xf32>
    %5 = vector.extract_strided_slice %0 {offsets = [0, 0, 1], sizes = [1, 16, 15], strides = [1, 1, 1]} : vector<1x16x16xf32> to vector<1x16x15xf32>
    %6 = vector.extract_strided_slice %0 {offsets = [0, 0, 14], sizes = [1, 16, 1], strides = [1, 1, 1]} : vector<1x16x16xf32> to vector<1x16x1xf32>
    %7 = tpu.concatenate %5, %6 in 2 : vector<1x16x15xf32>, vector<1x16x1xf32> -> vector<1x16x16xf32>
    %8 = arith.addf %0, %4 : vector<1x16x16xf32>
    %9 = arith.addf %8, %7 : vector<1x16x16xf32>
    %10 = vector.extract_strided_slice %9 {offsets = [0, 1, 0], sizes = [1, 1, 16], strides = [1, 1, 1]} : vector<1x16x16xf32> to vector<1x1x16xf32>
    %11 = vector.extract_strided_slice %9 {offsets = [0, 0, 0], sizes = [1, 15, 16], strides = [1, 1, 1]} : vector<1x16x16xf32> to vector<1x15x16xf32>
    %12 = tpu.concatenate %10, %11 in 1 : vector<1x1x16xf32>, vector<1x15x16xf32> -> vector<1x16x16xf32>
    %13 = vector.extract_strided_slice %9 {offsets = [0, 1, 0], sizes = [1, 15, 16], strides = [1, 1, 1]} : vector<1x16x16xf32> to vector<1x15x16xf32>
    %14 = vector.extract_strided_slice %9 {offsets = [0, 14, 0], sizes = [1, 1, 16], strides = [1, 1, 1]} : vector<1x16x16xf32> to vector<1x1x16xf32>
    %15 = tpu.concatenate %13, %14 in 1 : vector<1x15x16xf32>, vector<1x1x16xf32> -> vector<1x16x16xf32>
    %16 = arith.addf %9, %12 : vector<1x16x16xf32>
    %17 = arith.addf %16, %15 : vector<1x16x16xf32>
    %18 = vector.extract_strided_slice %1 {offsets = [0, 0, 1], sizes = [1, 16, 1], strides = [1, 1, 1]} : vector<1x16x16xf32> to vector<1x16x1xf32>
    %19 = vector.extract_strided_slice %1 {offsets = [0, 0, 0], sizes = [1, 16, 15], strides = [1, 1, 1]} : vector<1x16x16xf32> to vector<1x16x15xf32>
    %20 = tpu.concatenate %18, %19 in 2 : vector<1x16x1xf32>, vector<1x16x15xf32> -> vector<1x16x16xf32>
    %21 = vector.extract_strided_slice %1 {offsets = [0, 0, 1], sizes = [1, 16, 15], strides = [1, 1, 1]} : vector<1x16x16xf32> to vector<1x16x15xf32>
    %22 = vector.extract_strided_slice %1 {offsets = [0, 0, 14], sizes = [1, 16, 1], strides = [1, 1, 1]} : vector<1x16x16xf32> to vector<1x16x1xf32>
    %23 = tpu.concatenate %21, %22 in 2 : vector<1x16x15xf32>, vector<1x16x1xf32> -> vector<1x16x16xf32>
    %24 = arith.addf %1, %20 : vector<1x16x16xf32>
    %25 = arith.addf %24, %23 : vector<1x16x16xf32>
    %26 = vector.extract_strided_slice %25 {offsets = [0, 1, 0], sizes = [1, 1, 16], strides = [1, 1, 1]} : vector<1x16x16xf32> to vector<1x1x16xf32>
    %27 = vector.extract_strided_slice %25 {offsets = [0, 0, 0], sizes = [1, 15, 16], strides = [1, 1, 1]} : vector<1x16x16xf32> to vector<1x15x16xf32>
    %28 = tpu.concatenate %26, %27 in 1 : vector<1x1x16xf32>, vector<1x15x16xf32> -> vector<1x16x16xf32>
    %29 = vector.extract_strided_slice %25 {offsets = [0, 1, 0], sizes = [1, 15, 16], strides = [1, 1, 1]} : vector<1x16x16xf32> to vector<1x15x16xf32>
    %30 = vector.extract_strided_slice %25 {offsets = [0, 14, 0], sizes = [1, 1, 16], strides = [1, 1, 1]} : vector<1x16x16xf32> to vector<1x1x16xf32>
    %31 = tpu.concatenate %29, %30 in 1 : vector<1x15x16xf32>, vector<1x1x16xf32> -> vector<1x16x16xf32>
    %32 = arith.addf %25, %28 : vector<1x16x16xf32>
    %33 = arith.addf %32, %31 : vector<1x16x16xf32>
    %34 = arith.mulf %0, %0 : vector<1x16x16xf32>
    %35 = vector.extract_strided_slice %34 {offsets = [0, 0, 1], sizes = [1, 16, 1], strides = [1, 1, 1]} : vector<1x16x16xf32> to vector<1x16x1xf32>
    %36 = vector.extract_strided_slice %34 {offsets = [0, 0, 0], sizes = [1, 16, 15], strides = [1, 1, 1]} : vector<1x16x16xf32> to vector<1x16x15xf32>
    %37 = tpu.concatenate %35, %36 in 2 : vector<1x16x1xf32>, vector<1x16x15xf32> -> vector<1x16x16xf32>
    %38 = vector.extract_strided_slice %34 {offsets = [0, 0, 1], sizes = [1, 16, 15], strides = [1, 1, 1]} : vector<1x16x16xf32> to vector<1x16x15xf32>
    %39 = vector.extract_strided_slice %34 {offsets = [0, 0, 14], sizes = [1, 16, 1], strides = [1, 1, 1]} : vector<1x16x16xf32> to vector<1x16x1xf32>
    %40 = tpu.concatenate %38, %39 in 2 : vector<1x16x15xf32>, vector<1x16x1xf32> -> vector<1x16x16xf32>
    %41 = arith.addf %34, %37 : vector<1x16x16xf32>
    %42 = arith.addf %41, %40 : vector<1x16x16xf32>
    %43 = vector.extract_strided_slice %42 {offsets = [0, 1, 0], sizes = [1, 1, 16], strides = [1, 1, 1]} : vector<1x16x16xf32> to vector<1x1x16xf32>
    %44 = vector.extract_strided_slice %42 {offsets = [0, 0, 0], sizes = [1, 15, 16], strides = [1, 1, 1]} : vector<1x16x16xf32> to vector<1x15x16xf32>
    %45 = tpu.concatenate %43, %44 in 1 : vector<1x1x16xf32>, vector<1x15x16xf32> -> vector<1x16x16xf32>
    %46 = vector.extract_strided_slice %42 {offsets = [0, 1, 0], sizes = [1, 15, 16], strides = [1, 1, 1]} : vector<1x16x16xf32> to vector<1x15x16xf32>
    %47 = vector.extract_strided_slice %42 {offsets = [0, 14, 0], sizes = [1, 1, 16], strides = [1, 1, 1]} : vector<1x16x16xf32> to vector<1x1x16xf32>
    %48 = tpu.concatenate %46, %47 in 1 : vector<1x15x16xf32>, vector<1x1x16xf32> -> vector<1x16x16xf32>
    %49 = arith.addf %42, %45 : vector<1x16x16xf32>
    %50 = arith.addf %49, %48 : vector<1x16x16xf32>
    %51 = arith.mulf %1, %1 : vector<1x16x16xf32>
    %52 = vector.extract_strided_slice %51 {offsets = [0, 0, 1], sizes = [1, 16, 1], strides = [1, 1, 1]} : vector<1x16x16xf32> to vector<1x16x1xf32>
    %53 = vector.extract_strided_slice %51 {offsets = [0, 0, 0], sizes = [1, 16, 15], strides = [1, 1, 1]} : vector<1x16x16xf32> to vector<1x16x15xf32>
    %54 = tpu.concatenate %52, %53 in 2 : vector<1x16x1xf32>, vector<1x16x15xf32> -> vector<1x16x16xf32>
    %55 = vector.extract_strided_slice %51 {offsets = [0, 0, 1], sizes = [1, 16, 15], strides = [1, 1, 1]} : vector<1x16x16xf32> to vector<1x16x15xf32>
    %56 = vector.extract_strided_slice %51 {offsets = [0, 0, 14], sizes = [1, 16, 1], strides = [1, 1, 1]} : vector<1x16x16xf32> to vector<1x16x1xf32>
    %57 = tpu.concatenate %55, %56 in 2 : vector<1x16x15xf32>, vector<1x16x1xf32> -> vector<1x16x16xf32>
    %58 = arith.addf %51, %54 : vector<1x16x16xf32>
    %59 = arith.addf %58, %57 : vector<1x16x16xf32>
    %60 = vector.extract_strided_slice %59 {offsets = [0, 1, 0], sizes = [1, 1, 16], strides = [1, 1, 1]} : vector<1x16x16xf32> to vector<1x1x16xf32>
    %61 = vector.extract_strided_slice %59 {offsets = [0, 0, 0], sizes = [1, 15, 16], strides = [1, 1, 1]} : vector<1x16x16xf32> to vector<1x15x16xf32>
    %62 = tpu.concatenate %60, %61 in 1 : vector<1x1x16xf32>, vector<1x15x16xf32> -> vector<1x16x16xf32>
    %63 = vector.extract_strided_slice %59 {offsets = [0, 1, 0], sizes = [1, 15, 16], strides = [1, 1, 1]} : vector<1x16x16xf32> to vector<1x15x16xf32>
    %64 = vector.extract_strided_slice %59 {offsets = [0, 14, 0], sizes = [1, 1, 16], strides = [1, 1, 1]} : vector<1x16x16xf32> to vector<1x1x16xf32>
    %65 = tpu.concatenate %63, %64 in 1 : vector<1x15x16xf32>, vector<1x1x16xf32> -> vector<1x16x16xf32>
    %66 = arith.addf %59, %62 : vector<1x16x16xf32>
    %67 = arith.addf %66, %65 : vector<1x16x16xf32>
    %68 = arith.mulf %0, %1 : vector<1x16x16xf32>
    %69 = vector.extract_strided_slice %68 {offsets = [0, 0, 1], sizes = [1, 16, 1], strides = [1, 1, 1]} : vector<1x16x16xf32> to vector<1x16x1xf32>
    %70 = vector.extract_strided_slice %68 {offsets = [0, 0, 0], sizes = [1, 16, 15], strides = [1, 1, 1]} : vector<1x16x16xf32> to vector<1x16x15xf32>
    %71 = tpu.concatenate %69, %70 in 2 : vector<1x16x1xf32>, vector<1x16x15xf32> -> vector<1x16x16xf32>
    %72 = vector.extract_strided_slice %68 {offsets = [0, 0, 1], sizes = [1, 16, 15], strides = [1, 1, 1]} : vector<1x16x16xf32> to vector<1x16x15xf32>
    %73 = vector.extract_strided_slice %68 {offsets = [0, 0, 14], sizes = [1, 16, 1], strides = [1, 1, 1]} : vector<1x16x16xf32> to vector<1x16x1xf32>
    %74 = tpu.concatenate %72, %73 in 2 : vector<1x16x15xf32>, vector<1x16x1xf32> -> vector<1x16x16xf32>
    %75 = arith.addf %68, %71 : vector<1x16x16xf32>
    %76 = arith.addf %75, %74 : vector<1x16x16xf32>
    %77 = vector.extract_strided_slice %76 {offsets = [0, 1, 0], sizes = [1, 1, 16], strides = [1, 1, 1]} : vector<1x16x16xf32> to vector<1x1x16xf32>
    %78 = vector.extract_strided_slice %76 {offsets = [0, 0, 0], sizes = [1, 15, 16], strides = [1, 1, 1]} : vector<1x16x16xf32> to vector<1x15x16xf32>
    %79 = tpu.concatenate %77, %78 in 1 : vector<1x1x16xf32>, vector<1x15x16xf32> -> vector<1x16x16xf32>
    %80 = vector.extract_strided_slice %76 {offsets = [0, 1, 0], sizes = [1, 15, 16], strides = [1, 1, 1]} : vector<1x16x16xf32> to vector<1x15x16xf32>
    %81 = vector.extract_strided_slice %76 {offsets = [0, 14, 0], sizes = [1, 1, 16], strides = [1, 1, 1]} : vector<1x16x16xf32> to vector<1x1x16xf32>
    %82 = tpu.concatenate %80, %81 in 1 : vector<1x15x16xf32>, vector<1x1x16xf32> -> vector<1x16x16xf32>
    %83 = arith.addf %76, %79 : vector<1x16x16xf32>
    %84 = arith.addf %83, %82 : vector<1x16x16xf32>
    %cst = arith.constant 0.111111112 : f32
    %85 = vector.broadcast %cst : f32 to vector<1x16x16xf32>
    %86 = arith.mulf %17, %85 : vector<1x16x16xf32>
    %cst_5 = arith.constant 0.111111112 : f32
    %87 = vector.broadcast %cst_5 : f32 to vector<1x16x16xf32>
    %88 = arith.mulf %33, %87 : vector<1x16x16xf32>
    %cst_6 = arith.constant 0.111111112 : f32
    %89 = vector.broadcast %cst_6 : f32 to vector<1x16x16xf32>
    %90 = arith.mulf %50, %89 : vector<1x16x16xf32>
    %91 = arith.mulf %86, %86 : vector<1x16x16xf32>
    %92 = arith.subf %90, %91 : vector<1x16x16xf32>
    %cst_7 = arith.constant 0.111111112 : f32
    %93 = vector.broadcast %cst_7 : f32 to vector<1x16x16xf32>
    %94 = arith.mulf %67, %93 : vector<1x16x16xf32>
    %95 = arith.mulf %88, %88 : vector<1x16x16xf32>
    %96 = arith.subf %94, %95 : vector<1x16x16xf32>
    %cst_8 = arith.constant 0.111111112 : f32
    %97 = vector.broadcast %cst_8 : f32 to vector<1x16x16xf32>
    %98 = arith.mulf %84, %97 : vector<1x16x16xf32>
    %99 = arith.mulf %86, %88 : vector<1x16x16xf32>
    %100 = arith.subf %98, %99 : vector<1x16x16xf32>
    %cst_9 = arith.constant 2.000000e+00 : f32
    %101 = vector.broadcast %cst_9 : f32 to vector<1x16x16xf32>
    %102 = arith.mulf %101, %86 : vector<1x16x16xf32>
    %103 = arith.mulf %102, %88 : vector<1x16x16xf32>
    %cst_10 = arith.constant 9.99999974E-5 : f32
    %104 = vector.broadcast %cst_10 : f32 to vector<1x16x16xf32>
    %105 = arith.addf %103, %104 : vector<1x16x16xf32>
    %cst_11 = arith.constant 2.000000e+00 : f32
    %106 = vector.broadcast %cst_11 : f32 to vector<1x16x16xf32>
    %107 = arith.mulf %106, %100 : vector<1x16x16xf32>
    %cst_12 = arith.constant 8.99999984E-4 : f32
    %108 = vector.broadcast %cst_12 : f32 to vector<1x16x16xf32>
    %109 = arith.addf %107, %108 : vector<1x16x16xf32>
    %110 = arith.mulf %105, %109 : vector<1x16x16xf32>
    %111 = arith.mulf %86, %86 : vector<1x16x16xf32>
    %112 = arith.mulf %88, %88 : vector<1x16x16xf32>
    %113 = arith.addf %111, %112 : vector<1x16x16xf32>
    %cst_13 = arith.constant 9.99999974E-5 : f32
    %114 = vector.broadcast %cst_13 : f32 to vector<1x16x16xf32>
    %115 = arith.addf %113, %114 : vector<1x16x16xf32>
    %116 = arith.addf %92, %96 : vector<1x16x16xf32>
    %cst_14 = arith.constant 8.99999984E-4 : f32
    %117 = vector.broadcast %cst_14 : f32 to vector<1x16x16xf32>
    %118 = arith.addf %116, %117 : vector<1x16x16xf32>
    %119 = arith.mulf %115, %118 : vector<1x16x16xf32>
    %120 = arith.divf %110, %119 : vector<1x16x16xf32>
    %cst_15 = arith.constant 1.000000e+00 : f32
    %121 = vector.broadcast %cst_15 : f32 to vector<1x16x16xf32>
    %122 = arith.subf %121, %120 : vector<1x16x16xf32>
    %cst_16 = arith.constant 5.000000e-01 : f32
    %123 = vector.broadcast %cst_16 : f32 to vector<1x16x16xf32>
    %124 = arith.mulf %122, %123 : vector<1x16x16xf32>
    %cst_17 = arith.constant 0.000000e+00 : f32
    %cst_18 = arith.constant 1.000000e+00 : f32
    %125 = vector.broadcast %cst_17 : f32 to vector<1x16x16xf32>
    %126 = arith.maximumf %125, %124 : vector<1x16x16xf32>
    %127 = vector.broadcast %cst_18 : f32 to vector<1x16x16xf32>
    %128 = arith.minimumf %127, %126 : vector<1x16x16xf32>
    %c0_19 = arith.constant 0 : index
    %c0_20 = arith.constant 0 : index
    %c0_21 = arith.constant 0 : index
    %129 = vector.load %arg3[%c0_19, %c0_20, %c0_21] : memref<1x16x16xf32, #tpu.memory_space<vmem>>, vector<1x16x16xf32>
    tpu.vector_store %arg3[%c0_19, %c0_20, %c0_21], %128 {strides = array<i32>} : memref<1x16x16xf32, #tpu.memory_space<vmem>>, vector<1x16x16xf32>,
    return
  }
  func.func @transform_0(%arg0: i32) -> (i32, i32, i32) {
    %c0_i32 = arith.constant 0 : i32
    %c0_i32_0 = arith.constant 0 : i32
    %c0_i32_1 = arith.constant 0 : i32
    return %arg0, %c0_i32, %c0_i32_0 : i32, i32, i32
  }
  func.func @transform_1(%arg0: i32) -> (i32, i32, i32) {
    %c0_i32 = arith.constant 0 : i32
    %c0_i32_0 = arith.constant 0 : i32
    %c0_i32_1 = arith.constant 0 : i32
    return %arg0, %c0_i32, %c0_i32_0 : i32, i32, i32
  }
  func.func @transform_2(%arg0: i32) -> (i32, i32, i32) {
    %c0_i32 = arith.constant 0 : i32
    %c0_i32_0 = arith.constant 0 : i32
    %c0_i32_1 = arith.constant 0 : i32
    return %arg0, %c0_i32, %c0_i32_0 : i32, i32, i32
  }
}

module attributes {stable_mosaic.version = 11 : i64} {
  func.func @_ssim_kernel_padded(%arg0: i32, %arg1: memref<4x18x18xf32, #tpu.memory_space<vmem>>, %arg2: memref<4x18x18xf32, #tpu.memory_space<vmem>>, %arg3: memref<4x16x16xf32, #tpu.memory_space<vmem>>) attributes {dimension_semantics = [#tpu.dimension_semantics<parallel>], iteration_bounds = array<i64: 2>, scalar_prefetch = 0 : i64, scratch_operands = 0 : i64, tpu.core_type = #tpu.core_type<tc>, window_params = [{transform_indices = @transform_0, window_bounds = array<i64: 4, 18, 18>}, {transform_indices = @transform_1, window_bounds = array<i64: 4, 18, 18>}, {transform_indices = @transform_2, window_bounds = array<i64: 4, 16, 16>}]} {
    %c0 = arith.constant 0 : index
    %c0_0 = arith.constant 0 : index
    %c0_1 = arith.constant 0 : index
    %0 = vector.load %arg1[%c0, %c0_0, %c0_1] : memref<4x18x18xf32, #tpu.memory_space<vmem>>, vector<4x18x18xf32>
    %c0_2 = arith.constant 0 : index
    %c0_3 = arith.constant 0 : index
    %c0_4 = arith.constant 0 : index
    %1 = vector.load %arg2[%c0_2, %c0_3, %c0_4] : memref<4x18x18xf32, #tpu.memory_space<vmem>>, vector<4x18x18xf32>
    %2 = vector.extract_strided_slice %0 {offsets = [0, 0, 0], sizes = [4, 18, 16], strides = [1, 1, 1]} : vector<4x18x18xf32> to vector<4x18x16xf32>
    %3 = vector.extract_strided_slice %0 {offsets = [0, 0, 1], sizes = [4, 18, 16], strides = [1, 1, 1]} : vector<4x18x18xf32> to vector<4x18x16xf32>
    %4 = arith.addf %2, %3 : vector<4x18x16xf32>
    %5 = vector.extract_strided_slice %0 {offsets = [0, 0, 2], sizes = [4, 18, 16], strides = [1, 1, 1]} : vector<4x18x18xf32> to vector<4x18x16xf32>
    %6 = arith.addf %4, %5 : vector<4x18x16xf32>
    %7 = vector.extract_strided_slice %6 {offsets = [0, 0, 0], sizes = [4, 16, 16], strides = [1, 1, 1]} : vector<4x18x16xf32> to vector<4x16x16xf32>
    %8 = vector.extract_strided_slice %6 {offsets = [0, 1, 0], sizes = [4, 16, 16], strides = [1, 1, 1]} : vector<4x18x16xf32> to vector<4x16x16xf32>
    %9 = arith.addf %7, %8 : vector<4x16x16xf32>
    %10 = vector.extract_strided_slice %6 {offsets = [0, 2, 0], sizes = [4, 16, 16], strides = [1, 1, 1]} : vector<4x18x16xf32> to vector<4x16x16xf32>
    %11 = arith.addf %9, %10 : vector<4x16x16xf32>
    %12 = vector.extract_strided_slice %1 {offsets = [0, 0, 0], sizes = [4, 18, 16], strides = [1, 1, 1]} : vector<4x18x18xf32> to vector<4x18x16xf32>
    %13 = vector.extract_strided_slice %1 {offsets = [0, 0, 1], sizes = [4, 18, 16], strides = [1, 1, 1]} : vector<4x18x18xf32> to vector<4x18x16xf32>
    %14 = arith.addf %12, %13 : vector<4x18x16xf32>
    %15 = vector.extract_strided_slice %1 {offsets = [0, 0, 2], sizes = [4, 18, 16], strides = [1, 1, 1]} : vector<4x18x18xf32> to vector<4x18x16xf32>
    %16 = arith.addf %14, %15 : vector<4x18x16xf32>
    %17 = vector.extract_strided_slice %16 {offsets = [0, 0, 0], sizes = [4, 16, 16], strides = [1, 1, 1]} : vector<4x18x16xf32> to vector<4x16x16xf32>
    %18 = vector.extract_strided_slice %16 {offsets = [0, 1, 0], sizes = [4, 16, 16], strides = [1, 1, 1]} : vector<4x18x16xf32> to vector<4x16x16xf32>
    %19 = arith.addf %17, %18 : vector<4x16x16xf32>
    %20 = vector.extract_strided_slice %16 {offsets = [0, 2, 0], sizes = [4, 16, 16], strides = [1, 1, 1]} : vector<4x18x16xf32> to vector<4x16x16xf32>
    %21 = arith.addf %19, %20 : vector<4x16x16xf32>
    %22 = arith.mulf %0, %0 : vector<4x18x18xf32>
    %23 = vector.extract_strided_slice %22 {offsets = [0, 0, 0], sizes = [4, 18, 16], strides = [1, 1, 1]} : vector<4x18x18xf32> to vector<4x18x16xf32>
    %24 = vector.extract_strided_slice %22 {offsets = [0, 0, 1], sizes = [4, 18, 16], strides = [1, 1, 1]} : vector<4x18x18xf32> to vector<4x18x16xf32>
    %25 = arith.addf %23, %24 : vector<4x18x16xf32>
    %26 = vector.extract_strided_slice %22 {offsets = [0, 0, 2], sizes = [4, 18, 16], strides = [1, 1, 1]} : vector<4x18x18xf32> to vector<4x18x16xf32>
    %27 = arith.addf %25, %26 : vector<4x18x16xf32>
    %28 = vector.extract_strided_slice %27 {offsets = [0, 0, 0], sizes = [4, 16, 16], strides = [1, 1, 1]} : vector<4x18x16xf32> to vector<4x16x16xf32>
    %29 = vector.extract_strided_slice %27 {offsets = [0, 1, 0], sizes = [4, 16, 16], strides = [1, 1, 1]} : vector<4x18x16xf32> to vector<4x16x16xf32>
    %30 = arith.addf %28, %29 : vector<4x16x16xf32>
    %31 = vector.extract_strided_slice %27 {offsets = [0, 2, 0], sizes = [4, 16, 16], strides = [1, 1, 1]} : vector<4x18x16xf32> to vector<4x16x16xf32>
    %32 = arith.addf %30, %31 : vector<4x16x16xf32>
    %33 = arith.mulf %1, %1 : vector<4x18x18xf32>
    %34 = vector.extract_strided_slice %33 {offsets = [0, 0, 0], sizes = [4, 18, 16], strides = [1, 1, 1]} : vector<4x18x18xf32> to vector<4x18x16xf32>
    %35 = vector.extract_strided_slice %33 {offsets = [0, 0, 1], sizes = [4, 18, 16], strides = [1, 1, 1]} : vector<4x18x18xf32> to vector<4x18x16xf32>
    %36 = arith.addf %34, %35 : vector<4x18x16xf32>
    %37 = vector.extract_strided_slice %33 {offsets = [0, 0, 2], sizes = [4, 18, 16], strides = [1, 1, 1]} : vector<4x18x18xf32> to vector<4x18x16xf32>
    %38 = arith.addf %36, %37 : vector<4x18x16xf32>
    %39 = vector.extract_strided_slice %38 {offsets = [0, 0, 0], sizes = [4, 16, 16], strides = [1, 1, 1]} : vector<4x18x16xf32> to vector<4x16x16xf32>
    %40 = vector.extract_strided_slice %38 {offsets = [0, 1, 0], sizes = [4, 16, 16], strides = [1, 1, 1]} : vector<4x18x16xf32> to vector<4x16x16xf32>
    %41 = arith.addf %39, %40 : vector<4x16x16xf32>
    %42 = vector.extract_strided_slice %38 {offsets = [0, 2, 0], sizes = [4, 16, 16], strides = [1, 1, 1]} : vector<4x18x16xf32> to vector<4x16x16xf32>
    %43 = arith.addf %41, %42 : vector<4x16x16xf32>
    %44 = arith.mulf %0, %1 : vector<4x18x18xf32>
    %45 = vector.extract_strided_slice %44 {offsets = [0, 0, 0], sizes = [4, 18, 16], strides = [1, 1, 1]} : vector<4x18x18xf32> to vector<4x18x16xf32>
    %46 = vector.extract_strided_slice %44 {offsets = [0, 0, 1], sizes = [4, 18, 16], strides = [1, 1, 1]} : vector<4x18x18xf32> to vector<4x18x16xf32>
    %47 = arith.addf %45, %46 : vector<4x18x16xf32>
    %48 = vector.extract_strided_slice %44 {offsets = [0, 0, 2], sizes = [4, 18, 16], strides = [1, 1, 1]} : vector<4x18x18xf32> to vector<4x18x16xf32>
    %49 = arith.addf %47, %48 : vector<4x18x16xf32>
    %50 = vector.extract_strided_slice %49 {offsets = [0, 0, 0], sizes = [4, 16, 16], strides = [1, 1, 1]} : vector<4x18x16xf32> to vector<4x16x16xf32>
    %51 = vector.extract_strided_slice %49 {offsets = [0, 1, 0], sizes = [4, 16, 16], strides = [1, 1, 1]} : vector<4x18x16xf32> to vector<4x16x16xf32>
    %52 = arith.addf %50, %51 : vector<4x16x16xf32>
    %53 = vector.extract_strided_slice %49 {offsets = [0, 2, 0], sizes = [4, 16, 16], strides = [1, 1, 1]} : vector<4x18x16xf32> to vector<4x16x16xf32>
    %54 = arith.addf %52, %53 : vector<4x16x16xf32>
    %cst = arith.constant 0.111111112 : f32
    %55 = vector.broadcast %cst : f32 to vector<4x16x16xf32>
    %56 = arith.mulf %11, %55 : vector<4x16x16xf32>
    %cst_5 = arith.constant 0.111111112 : f32
    %57 = vector.broadcast %cst_5 : f32 to vector<4x16x16xf32>
    %58 = arith.mulf %21, %57 : vector<4x16x16xf32>
    %cst_6 = arith.constant 0.111111112 : f32
    %59 = vector.broadcast %cst_6 : f32 to vector<4x16x16xf32>
    %60 = arith.mulf %32, %59 : vector<4x16x16xf32>
    %61 = arith.mulf %56, %56 : vector<4x16x16xf32>
    %62 = arith.subf %60, %61 : vector<4x16x16xf32>
    %cst_7 = arith.constant 0.111111112 : f32
    %63 = vector.broadcast %cst_7 : f32 to vector<4x16x16xf32>
    %64 = arith.mulf %43, %63 : vector<4x16x16xf32>
    %65 = arith.mulf %58, %58 : vector<4x16x16xf32>
    %66 = arith.subf %64, %65 : vector<4x16x16xf32>
    %cst_8 = arith.constant 0.111111112 : f32
    %67 = vector.broadcast %cst_8 : f32 to vector<4x16x16xf32>
    %68 = arith.mulf %54, %67 : vector<4x16x16xf32>
    %69 = arith.mulf %56, %58 : vector<4x16x16xf32>
    %70 = arith.subf %68, %69 : vector<4x16x16xf32>
    %cst_9 = arith.constant 2.000000e+00 : f32
    %71 = vector.broadcast %cst_9 : f32 to vector<4x16x16xf32>
    %72 = arith.mulf %71, %56 : vector<4x16x16xf32>
    %73 = arith.mulf %72, %58 : vector<4x16x16xf32>
    %cst_10 = arith.constant 9.99999974E-5 : f32
    %74 = vector.broadcast %cst_10 : f32 to vector<4x16x16xf32>
    %75 = arith.addf %73, %74 : vector<4x16x16xf32>
    %cst_11 = arith.constant 2.000000e+00 : f32
    %76 = vector.broadcast %cst_11 : f32 to vector<4x16x16xf32>
    %77 = arith.mulf %76, %70 : vector<4x16x16xf32>
    %cst_12 = arith.constant 8.99999984E-4 : f32
    %78 = vector.broadcast %cst_12 : f32 to vector<4x16x16xf32>
    %79 = arith.addf %77, %78 : vector<4x16x16xf32>
    %80 = arith.mulf %75, %79 : vector<4x16x16xf32>
    %81 = arith.mulf %56, %56 : vector<4x16x16xf32>
    %82 = arith.mulf %58, %58 : vector<4x16x16xf32>
    %83 = arith.addf %81, %82 : vector<4x16x16xf32>
    %cst_13 = arith.constant 9.99999974E-5 : f32
    %84 = vector.broadcast %cst_13 : f32 to vector<4x16x16xf32>
    %85 = arith.addf %83, %84 : vector<4x16x16xf32>
    %86 = arith.addf %62, %66 : vector<4x16x16xf32>
    %cst_14 = arith.constant 8.99999984E-4 : f32
    %87 = vector.broadcast %cst_14 : f32 to vector<4x16x16xf32>
    %88 = arith.addf %86, %87 : vector<4x16x16xf32>
    %89 = arith.mulf %85, %88 : vector<4x16x16xf32>
    %90 = arith.divf %80, %89 : vector<4x16x16xf32>
    %cst_15 = arith.constant 1.000000e+00 : f32
    %91 = vector.broadcast %cst_15 : f32 to vector<4x16x16xf32>
    %92 = arith.subf %91, %90 : vector<4x16x16xf32>
    %cst_16 = arith.constant 5.000000e-01 : f32
    %93 = vector.broadcast %cst_16 : f32 to vector<4x16x16xf32>
    %94 = arith.mulf %92, %93 : vector<4x16x16xf32>
    %cst_17 = arith.constant 0.000000e+00 : f32
    %cst_18 = arith.constant 1.000000e+00 : f32
    %95 = vector.broadcast %cst_17 : f32 to vector<4x16x16xf32>
    %96 = arith.maximumf %95, %94 : vector<4x16x16xf32>
    %97 = vector.broadcast %cst_18 : f32 to vector<4x16x16xf32>
    %98 = arith.minimumf %97, %96 : vector<4x16x16xf32>
    %c0_19 = arith.constant 0 : index
    %c0_20 = arith.constant 0 : index
    %c0_21 = arith.constant 0 : index
    %99 = vector.load %arg3[%c0_19, %c0_20, %c0_21] : memref<4x16x16xf32, #tpu.memory_space<vmem>>, vector<4x16x16xf32>
    tpu.vector_store %arg3[%c0_19, %c0_20, %c0_21], %98 {strides = array<i32>} : memref<4x16x16xf32, #tpu.memory_space<vmem>>, vector<4x16x16xf32>,
    return
  }
  func.func @transform_0(%arg0: i32) -> (i32, i32, i32) {
    %c0_i32 = arith.constant 0 : i32
    %c0_i32_0 = arith.constant 0 : i32
    %c0_i32_1 = arith.constant 0 : i32
    return %arg0, %c0_i32, %c0_i32_0 : i32, i32, i32
  }
  func.func @transform_1(%arg0: i32) -> (i32, i32, i32) {
    %c0_i32 = arith.constant 0 : i32
    %c0_i32_0 = arith.constant 0 : i32
    %c0_i32_1 = arith.constant 0 : i32
    return %arg0, %c0_i32, %c0_i32_0 : i32, i32, i32
  }
  func.func @transform_2(%arg0: i32) -> (i32, i32, i32) {
    %c0_i32 = arith.constant 0 : i32
    %c0_i32_0 = arith.constant 0 : i32
    %c0_i32_1 = arith.constant 0 : i32
    return %arg0, %c0_i32, %c0_i32_0 : i32, i32, i32
  }
}

</mosaic_0001>

<llo_original>
// kernel: tpu_custom_call.1
$region0: #{tpu_custom_call.1}
  #allocation0 [shape = 'u32[]', space=smem, size = 0x4, offset = 0x4, fixed_abs, tag = 'smem constant byte address 0x4 - core index']
  #allocation1 [shape = 'u32[72,128]{1,0:T(1,128)}', space=vmem, size = 0x9000, scoped, tag = 'internal scratch']
  %s0 = inlined_call_operand.hbm [shape: f32[1,16,16], index: 0, kind: input, shape index: {}]
  %s1 = inlined_call_operand.hbm [shape: f32[1,16,16], index: 1, kind: input, shape index: {}]
  %s2 = inlined_call_operand.hbm [shape: f32[1,16,16], index: 2, kind: output, shape index: {}]
  %s3 = sld [smem:[#allocation0]]
  $region26: #{tpu_custom_call.1} parent=0
    _
  %s5 = ssub.s32 1, %s3
  %s6 = scalar_select 0, %s5, %s3
  $region1: #{tpu_custom_call.1} parent=0
    #allocation2 [shape = 'u8[8192]{0}', space=vmem, size = 0x2000, scoped, tag = 'input window, operand 0, single buffered']
    #allocation3 [shape = 's32[1]{0}', space=sflag, size = 0x4, scoped, tag = 'scoped memory for tpu_custom_call.1']
    #allocation4 [shape = 's32[1]{0}', space=sflag, size = 0x4, scoped, tag = 'scoped memory for tpu_custom_call.1']
    #allocation5 [shape = 'u8[8192]{0}', space=vmem, size = 0x2000, scoped, tag = 'input window, operand 1, single buffered']
    #allocation6 [shape = 's32[1]{0}', space=sflag, size = 0x4, scoped, tag = 'scoped memory for tpu_custom_call.1']
    #allocation7 [shape = 'u8[8192]{0}', space=vmem, size = 0x2000, scoped, tag = 'output window, operand 0, single buffered']
    %7 = vsyncpa [#allocation3], 0
    %8 = vsyncpa [#allocation6], 0
    %9 = vsyncpa [#allocation4], 0
    // Predicated region
    $region2: #{tpu_custom_call.1} parent=1 // pred_check
      _
    $region3: #{tpu_custom_call.1} parent=1 // pred_check_branch
      %11 = sbr.rel (0) target = $region5
    $region4: #{tpu_custom_call.1} parent=1 // pred_region
      %13 = vsyncadd [#allocation3], 0
      %s14 = sshll.u32 %s0, 4
      %s15 = int_to_ptr.hbm [resolvable:$true] %s14
      %s16 = sshll.u32 [#allocation2], 4
      %s17 = int_to_ptr.vmem [resolvable:$true] %s16
      %22 = dma.hbm_to_vmem [thread:$0]  %s15, 256, %s17, [#allocation3], 128, 128, 8
    $region5: #{tpu_custom_call.1} parent=1 // pred_fallthru
      _
    // Predicated region
    $region6: #{tpu_custom_call.1} parent=1 // pred_check
      _
    $region7: #{tpu_custom_call.1} parent=1 // pred_check_branch
      %24 = sbr.rel (0) target = $region9
    $region8: #{tpu_custom_call.1} parent=1 // pred_region
      %26 = vsyncadd [#allocation6], 0
      %s27 = sshll.u32 %s1, 4
      %s28 = int_to_ptr.hbm [resolvable:$true] %s27
      %s29 = sshll.u32 [#allocation5], 4
      %s30 = int_to_ptr.vmem [resolvable:$true] %s29
      %35 = dma.hbm_to_vmem [thread:$0]  %s28, 256, %s30, [#allocation6], 128, 128, 8
    $region9: #{tpu_custom_call.1} parent=1 // pred_fallthru
      _
    // Predicated region
    $region10: #{tpu_custom_call.1} parent=1 // pred_check
      _
    $region11: #{tpu_custom_call.1} parent=1 // pred_check_branch
      %37 = sbr.rel (0) target = $region13
    $region12: #{tpu_custom_call.1} parent=1 // pred_region
      %39 = dma.done [#allocation3], 256
    $region13: #{tpu_custom_call.1} parent=1 // pred_fallthru
      _
    // Predicated region
    $region14: #{tpu_custom_call.1} parent=1 // pred_check
      _
    $region15: #{tpu_custom_call.1} parent=1 // pred_check_branch
      %41 = sbr.rel (0) target = $region17
    $region16: #{tpu_custom_call.1} parent=1 // pred_region
      %43 = dma.done [#allocation6], 256
    $region17: #{tpu_custom_call.1} parent=1 // pred_fallthru
      _
    %v44 = vld [vmem:[#allocation2] sm:$0xff]
    %v45 = vld [vmem:[#allocation2 + $0x8] sm:$0xff]
    %v46 = vld [vmem:[#allocation5] sm:$0xff]
    %v47 = vld [vmem:[#allocation5 + $0x8] sm:$0xff]
    %50 = vrot.lane.b32.xlu0 %v44, 127
    %v51 = vpop.permute.xlu0 %50
    %52 = vrot.lane.b32.xlu0 %v45, 127
    %v53 = vpop.permute.xlu0 %52
    %56 = vrot.lane.b32.xlu0 %v44, 1
    %v57 = vpop.permute.xlu0 %56
    %58 = vrot.lane.b32.xlu0 %v45, 1
    %v59 = vpop.permute.xlu0 %58
    %vm62 = vcmask 7168
    %v63 = vsel %vm62, %v51, %v57
    %v64 = vsel %vm62, %v53, %v59
    %vm65 = vcmask 121856
    %v66 = vsel %vm65, %v51, %v57
    %v67 = vsel %vm65, %v53, %v59
    %v68 = vadd.f32 %v44, %v63
    %v69 = vadd.f32 %v45, %v64
    %v70 = vadd.f32 %v68, %v66
    %v71 = vadd.f32 %v69, %v67
    %v73 = vrot.slane %v70, 1
    %vm76 = vcmask 1040384
    %v77 = vrot.slane %v70, 7
    %v78 = vrot.slane %v71, 7
    %v79 = vsel %vm76, %v77, %v78
    %v82 = vsel %vm76, %v73, %v77
    %vm83 = vcmask 1046528
    %v84 = vrot.slane %v71, 1
    %v85 = vsel %vm83, %v73, %v84
    %v89 = vsel %vm83, %v84, %v78
    %v90 = vadd.f32 %v70, %v82
    %v91 = vadd.f32 %v71, %v79
    %v92 = vadd.f32 %v90, %v85
    %v93 = vadd.f32 %v91, %v89
    %96 = vrot.lane.b32.xlu0 %v46, 127
    %v97 = vpop.permute.xlu0 %96
    %98 = vrot.lane.b32.xlu0 %v47, 127
    %v99 = vpop.permute.xlu0 %98
    %102 = vrot.lane.b32.xlu0 %v46, 1
    %v103 = vpop.permute.xlu0 %102
    %104 = vrot.lane.b32.xlu0 %v47, 1
    %v105 = vpop.permute.xlu0 %104
    %v108 = vsel %vm62, %v97, %v103
    %v109 = vsel %vm62, %v99, %v105
    %v110 = vsel %vm65, %v97, %v103
    %v111 = vsel %vm65, %v99, %v105
    %v112 = vadd.f32 %v46, %v108
    %v113 = vadd.f32 %v47, %v109
    %v114 = vadd.f32 %v112, %v110
    %v115 = vadd.f32 %v113, %v111
    %v117 = vrot.slane %v114, 1
    %v120 = vrot.slane %v114, 7
    %v121 = vrot.slane %v115, 7
    %v122 = vsel %vm76, %v120, %v121
    %v125 = vsel %vm76, %v117, %v120
    %v126 = vrot.slane %v115, 1
    %v127 = vsel %vm83, %v117, %v126
    %v131 = vsel %vm83, %v126, %v121
    %v132 = vadd.f32 %v114, %v125
    %v133 = vadd.f32 %v115, %v122
    %v134 = vadd.f32 %v132, %v127
    %v135 = vadd.f32 %v133, %v131
    %v136 = vmul.f32 %v44, %v44
    %v137 = vmul.f32 %v45, %v45
    %140 = vrot.lane.b32.xlu0 %v136, 127
    %v141 = vpop.permute.xlu0 %140
    %142 = vrot.lane.b32.xlu0 %v137, 127
    %v143 = vpop.permute.xlu0 %142
    %146 = vrot.lane.b32.xlu0 %v136, 1
    %v147 = vpop.permute.xlu0 %146
    %148 = vrot.lane.b32.xlu0 %v137, 1
    %v149 = vpop.permute.xlu0 %148
    %v152 = vsel %vm62, %v141, %v147
    %v153 = vsel %vm62, %v143, %v149
    %v154 = vsel %vm65, %v141, %v147
    %v155 = vsel %vm65, %v143, %v149
    %v156 = vadd.f32 %v136, %v152
    %v157 = vadd.f32 %v137, %v153
    %v158 = vadd.f32 %v156, %v154
    %v159 = vadd.f32 %v157, %v155
    %v161 = vrot.slane %v158, 1
    %v164 = vrot.slane %v158, 7
    %v165 = vrot.slane %v159, 7
    %v166 = vsel %vm76, %v164, %v165
    %v169 = vsel %vm76, %v161, %v164
    %v170 = vrot.slane %v159, 1
    %v171 = vsel %vm83, %v161, %v170
    %v175 = vsel %vm83, %v170, %v165
    %v176 = vadd.f32 %v158, %v169
    %v177 = vadd.f32 %v159, %v166
    %v178 = vadd.f32 %v176, %v171
    %v179 = vadd.f32 %v177, %v175
    %v180 = vmul.f32 %v46, %v46
    %v181 = vmul.f32 %v47, %v47
    %184 = vrot.lane.b32.xlu0 %v180, 127
    %v185 = vpop.permute.xlu0 %184
    %186 = vrot.lane.b32.xlu0 %v181, 127
    %v187 = vpop.permute.xlu0 %186
    %190 = vrot.lane.b32.xlu0 %v180, 1
    %v191 = vpop.permute.xlu0 %190
    %192 = vrot.lane.b32.xlu0 %v181, 1
    %v193 = vpop.permute.xlu0 %192
    %v196 = vsel %vm62, %v185, %v191
    %v197 = vsel %vm62, %v187, %v193
    %v198 = vsel %vm65, %v185, %v191
    %v199 = vsel %vm65, %v187, %v193
    %v200 = vadd.f32 %v180, %v196
    %v201 = vadd.f32 %v181, %v197
    %v202 = vadd.f32 %v200, %v198
    %v203 = vadd.f32 %v201, %v199
    %v205 = vrot.slane %v202, 1
    %v208 = vrot.slane %v202, 7
    %v209 = vrot.slane %v203, 7
    %v210 = vsel %vm76, %v208, %v209
    %v213 = vsel %vm76, %v205, %v208
    %v214 = vrot.slane %v203, 1
    %v215 = vsel %vm83, %v205, %v214
    %v219 = vsel %vm83, %v214, %v209
    %v220 = vadd.f32 %v202, %v213
    %v221 = vadd.f32 %v203, %v210
    %v222 = vadd.f32 %v220, %v215
    %v223 = vadd.f32 %v221, %v219
    %v224 = vmul.f32 %v44, %v46
    %v225 = vmul.f32 %v45, %v47
    %228 = vrot.lane.b32.xlu0 %v224, 127
    %v229 = vpop.permute.xlu0 %228
    %230 = vrot.lane.b32.xlu0 %v225, 127
    %v231 = vpop.permute.xlu0 %230
    %234 = vrot.lane.b32.xlu0 %v224, 1
    %v235 = vpop.permute.xlu0 %234
    %236 = vrot.lane.b32.xlu0 %v225, 1
    %v237 = vpop.permute.xlu0 %236
    %v240 = vsel %vm62, %v229, %v235
    %v241 = vsel %vm62, %v231, %v237
    %v242 = vsel %vm65, %v229, %v235
    %v243 = vsel %vm65, %v231, %v237
    %v244 = vadd.f32 %v224, %v240
    %v245 = vadd.f32 %v225, %v241
    %v246 = vadd.f32 %v244, %v242
    %v247 = vadd.f32 %v245, %v243
    %v249 = vrot.slane %v246, 1
    %v252 = vrot.slane %v246, 7
    %v253 = vrot.slane %v247, 7
    %v254 = vsel %vm76, %v252, %v253
    %v257 = vsel %vm76, %v249, %v252
    %v258 = vrot.slane %v247, 1
    %v259 = vsel %vm83, %v249, %v258
    %v263 = vsel %vm83, %v258, %v253
    %v264 = vadd.f32 %v246, %v257
    %v265 = vadd.f32 %v247, %v254
    %v266 = vadd.f32 %v264, %v259
    %v267 = vadd.f32 %v265, %v263
    %v268 = vmul.f32 %v92, 0.11111111
    %v269 = vmul.f32 %v93, 0.11111111
    %v270 = vmul.f32 %v134, 0.11111111
    %v271 = vmul.f32 %v135, 0.11111111
    %v272 = vmul.f32 %v178, 0.11111111
    %v273 = vmul.f32 %v179, 0.11111111
    %v274 = vmul.f32 %v268, %v268
    %v275 = vmul.f32 %v269, %v269
    %v276 = vsub.f32 %v272, %v274
    %v277 = vsub.f32 %v273, %v275
    %v278 = vmul.f32 %v222, 0.11111111
    %v279 = vmul.f32 %v223, 0.11111111
    %v280 = vmul.f32 %v270, %v270
    %v281 = vmul.f32 %v271, %v271
    %v282 = vsub.f32 %v278, %v280
    %v283 = vsub.f32 %v279, %v281
    %v284 = vmul.f32 %v266, 0.11111111
    %v285 = vmul.f32 %v267, 0.11111111
    %v286 = vmul.f32 %v268, %v270
    %v287 = vmul.f32 %v269, %v271
    %v288 = vsub.f32 %v284, %v286
    %v289 = vsub.f32 %v285, %v287
    %v290 = vmul.f32 %v268, 2.0
    %v291 = vmul.f32 %v269, 2.0
    %v292 = vmul.f32 %v290, %v270
    %v293 = vmul.f32 %v291, %v271
    %v294 = vadd.f32 %v292, 0.0001
    %v295 = vadd.f32 %v293, 0.0001
    %v296 = vmul.f32 %v288, 2.0
    %v297 = vmul.f32 %v289, 2.0
    %v298 = vadd.f32 %v296, 0.0009
    %v299 = vadd.f32 %v297, 0.0009
    %v300 = vmul.f32 %v294, %v298
    %v301 = vmul.f32 %v295, %v299
    %v302 = vadd.f32 %v274, %v280
    %v303 = vadd.f32 %v275, %v281
    %v304 = vadd.f32 %v302, 0.0001
    %v305 = vadd.f32 %v303, 0.0001
    %v306 = vadd.f32 %v276, %v282
    %v307 = vadd.f32 %v277, %v283
    %v308 = vadd.f32 %v306, 0.0009
    %v309 = vadd.f32 %v307, 0.0009
    %v310 = vmul.f32 %v304, %v308
    %v311 = vmul.f32 %v305, %v309
    %v312 = vrcp.pop %v310
    %v313 = vmul.f32 %v310, %v312
    %v314 = vsub.f32 1.0, %v313
    %v315 = vmul.f32 %v312, %v314
    %v316 = vadd.f32 %v312, %v315
    %vm317 = vweird.f32 %v310
    %vm318 = vweird.f32 %v312
    %vm319 = vmor %vm317, %vm318
    %v320 = vsel %vm319, %v312, %v316
    %v321 = vand.u32 2147483647, %v310
    %vm322 = vcmp.eq.f32.partialorder %v321, 8.507059e+37
    %v323 = vand.u32 %v310, 2147483648
    %v324 = vor.u32 1.1754944e-38, %v323
    %v325 = vsel %vm322, %v324, %v320
    %v326 = vmul.f32 %v300, %v325
    %v327 = vrcp.pop %v311
    %v328 = vmul.f32 %v311, %v327
    %v329 = vsub.f32 1.0, %v328
    %v330 = vmul.f32 %v327, %v329
    %v331 = vadd.f32 %v327, %v330
    %vm332 = vweird.f32 %v311
    %vm333 = vweird.f32 %v327
    %vm334 = vmor %vm332, %vm333
    %v335 = vsel %vm334, %v327, %v331
    %v336 = vand.u32 2147483647, %v311
    %vm337 = vcmp.eq.f32.partialorder %v336, 8.507059e+37
    %v338 = vand.u32 %v311, 2147483648
    %v339 = vor.u32 1.1754944e-38, %v338
    %v340 = vsel %vm337, %v339, %v335
    %v341 = vmul.f32 %v301, %v340
    %v342 = vsub.f32 1.0, %v326
    %v343 = vsub.f32 1.0, %v341
    %v344 = vmul.f32 %v342, 0.5
    %v345 = vmul.f32 %v343, 0.5
    %v346 = vmax.f32 %v344, 0.0
    %v347 = vmax.f32 %v345, 0.0
    %v348 = vmin.f32 %v346, 1.0
    %v349 = vmin.f32 %v347, 1.0
    %vm350 = vcmask 130048
    %351 = vst.msk [vmem:[#allocation7] sm:$0xff] %vm350, %v348
    %352 = vst.msk [vmem:[#allocation7 + $0x8] sm:$0xff] %vm350, %v349
    // Predicated region
    $region18: #{tpu_custom_call.1} parent=1 // pred_check
      _
    $region19: #{tpu_custom_call.1} parent=1 // pred_check_branch
      %354 = sbr.rel (0) target = $region21
    $region20: #{tpu_custom_call.1} parent=1 // pred_region
      %356 = vsyncadd [#allocation4], 0
      %s357 = sshll.u32 [#allocation7], 4
      %s358 = int_to_ptr.vmem [resolvable:$true] %s357
      %s359 = sshll.u32 %s2, 4
      %s360 = int_to_ptr.hbm [resolvable:$true] %s359
      %365 = dma.vmem_to_hbm [thread:$0]  %s358, 256, %s360, [#allocation4], 128, 128, 8
    $region21: #{tpu_custom_call.1} parent=1 // pred_fallthru
      _
    // Predicated region
    $region22: #{tpu_custom_call.1} parent=1 // pred_check
      _
    $region23: #{tpu_custom_call.1} parent=1 // pred_check_branch
      %367 = sbr.rel (0) target = $region25
    $region24: #{tpu_custom_call.1} parent=1 // pred_region
      %369 = dma.done [#allocation4], 256
    $region25: #{tpu_custom_call.1} parent=1 // pred_fallthru
      _
    %370 = vsyncpa [#allocation3], 1
    %371 = vsyncpa [#allocation6], 1
    %372 = vsyncpa [#allocation4], 1

// kernel: tpu_custom_call.1
$region0: #{tpu_custom_call.1}
  #allocation0 [shape = 'u32[]', space=smem, size = 0x4, offset = 0x4, fixed_abs, tag = 'smem constant byte address 0x4 - core index']
  #allocation1 [shape = 'u32[72,128]{1,0:T(1,128)}', space=vmem, size = 0x9000, scoped, tag = 'internal scratch']
  %s0 = inlined_call_operand.vmem [shape: f32[8,18,18], index: 0, kind: input, shape index: {}]
  %s1 = inlined_call_operand.vmem [shape: f32[8,18,18], index: 1, kind: input, shape index: {}]
  %s2 = inlined_call_operand.hbm [shape: f32[8,16,16], index: 2, kind: output, shape index: {}]
  %s3 = sld [smem:[#allocation0]]
  $region41: #{tpu_custom_call.1} parent=0
    _
  %s5 = ssub.s32 1, %s3
  %s6 = scalar_select 0, %s5, %s3
  $region1: #{tpu_custom_call.1} parent=0
    #allocation2 [shape = 'u8[65536]{0}', space=vmem, size = 0x10000, scoped, tag = 'output window, operand 0']
    #allocation3 [shape = 's32[2]{0}', space=sflag, size = 0x8, scoped, tag = 'scoped memory for tpu_custom_call.1']
    %7 = vsyncpa [#allocation3], 0
    %s8 = scalar_lea.sflag [#allocation3], 1
    %9 = vsyncpa %s8, 0
    loop: start=0, step=1, limit=4
    $region2: #{tpu_custom_call.1} parent=1 // loop_pre_header
      _
    $region3: #{tpu_custom_call.1} parent=1 // loop_header
      %s11 = sphi 0, %s15
      %p12 = scmp.ge.s32.totalorder %s11, 4
      %s21 = sphi 0, %s23
      %s24 = sphi 0, %s21
      %s25 = sphi 0, %s24
      %s41 = sphi 0, %s25
      %s47 = sphi 0, %s49
      %s50 = sphi 0, %s47
      %s51 = sphi 0, %s50
      %s67 = sphi 0, %s51
      %s73 = sphi 0, %s75
      %s76 = sphi 0, %s73
      %s77 = sphi 0, %s76
      %s93 = sphi 0, %s77
    $region4: #{tpu_custom_call.1} parent=1 // loop_header_branch
      %14 = sbr.rel (%p12) target = $region8
    $region5: #{tpu_custom_call.1} parent=1 // loop_body
      %s16 = ssub.s32 %s11, 1
      %s17 = ssub.s32 %s11, 2
      %s18 = sadd.s32 %s11, 1
      %s19 = ssub.s32 %s11, %s18
      %p20 = scmp.eq.s32.totalorder %s19, 0
      %s22 = sadd.s32 %s21, 1
      %s23 = scalar_select %p20, %s21, %s22
      %p26 = pneg %p20
      %p27 = scmp.eq.s32.totalorder %s11, 1
      %p28 = por %p26, %p27
      %p29 = scmp.ne.s32.totalorder %s21, %s24
      %p30 = scmp.eq.s32.totalorder %s11, 0
      %p31 = por %p29, %p30
      %p32 = scmp.ne.s32.totalorder %s21, %s24
      %p33 = scmp.eq.s32.totalorder %s16, 1
      %p34 = por %p32, %p33
      %p35 = scmp.ne.s32.totalorder %s24, %s25
      %p36 = scmp.eq.s32.totalorder %s16, 0
      %p37 = por %p35, %p36
      %p38 = scmp.ne.s32.totalorder %s24, %s25
      %p39 = scmp.eq.s32.totalorder %s17, 1
      %p40 = por %p38, %p39
      %p42 = scmp.ne.s32.totalorder %s25, %s41
      %p43 = scmp.eq.s32.totalorder %s17, 0
      %p44 = por %p42, %p43
      %s45 = ssub.s32 %s11, %s18
      %p46 = scmp.eq.s32.totalorder %s45, 0
      %s48 = sadd.s32 %s47, 1
      %s49 = scalar_select %p46, %s47, %s48
      %p52 = pneg %p46
      %p53 = scmp.eq.s32.totalorder %s11, 1
      %p54 = por %p52, %p53
      %p55 = scmp.ne.s32.totalorder %s47, %s50
      %p56 = scmp.eq.s32.totalorder %s11, 0
      %p57 = por %p55, %p56
      %p58 = scmp.ne.s32.totalorder %s47, %s50
      %p59 = scmp.eq.s32.totalorder %s16, 1
      %p60 = por %p58, %p59
      %p61 = scmp.ne.s32.totalorder %s50, %s51
      %p62 = scmp.eq.s32.totalorder %s16, 0
      %p63 = por %p61, %p62
      %p64 = scmp.ne.s32.totalorder %s50, %s51
      %p65 = scmp.eq.s32.totalorder %s17, 1
      %p66 = por %p64, %p65
      %p68 = scmp.ne.s32.totalorder %s51, %s67
      %p69 = scmp.eq.s32.totalorder %s17, 0
      %p70 = por %p68, %p69
      %s71 = ssub.s32 %s11, %s18
      %p72 = scmp.eq.s32.totalorder %s71, 0
      %s74 = sadd.s32 %s73, 1
      %s75 = scalar_select %p72, %s73, %s74
      %p78 = pneg %p72
      %p79 = scmp.eq.s32.totalorder %s11, 1
      %p80 = por %p78, %p79
      %p81 = scmp.ne.s32.totalorder %s73, %s76
      %p82 = scmp.eq.s32.totalorder %s11, 0
      %p83 = por %p81, %p82
      %p84 = scmp.ne.s32.totalorder %s73, %s76
      %p85 = scmp.eq.s32.totalorder %s16, 1
      %p86 = por %p84, %p85
      %p87 = scmp.ne.s32.totalorder %s76, %s77
      %p88 = scmp.eq.s32.totalorder %s16, 0
      %p89 = por %p87, %p88
      %p90 = scmp.ne.s32.totalorder %s76, %s77
      %p91 = scmp.eq.s32.totalorder %s17, 1
      %p92 = por %p90, %p91
      %p94 = scmp.ne.s32.totalorder %s77, %s93
      %p95 = scmp.eq.s32.totalorder %s17, 0
      %p96 = por %p94, %p95
      %p97 = scmp.le.s32.totalorder 1, %s11
      %p98 = scmp.lt.s32.totalorder %s11, 3
      %p99 = pnand %p97, %p98
      %p100 = pneg %p99
      // Predicated region
      $region9: #{tpu_custom_call.1} parent=5 // pred_check
        _
      $region10: #{tpu_custom_call.1} parent=5 // pred_check_branch
        %102 = sbr.rel (%p99) target = $region12
      $region11: #{tpu_custom_call.1} parent=5 // pred_region
        %s103 = ssub.s32 %s11, 1
      $region12: #{tpu_custom_call.1} parent=5 // pred_fallthru
        _
      %p104 = scmp.lt.s32.totalorder %s11, 2
      // Predicated region
      $region13: #{tpu_custom_call.1} parent=5 // pred_check
        %p105 = pneg %p104
      $region14: #{tpu_custom_call.1} parent=5 // pred_check_branch
        %107 = sbr.rel (%p105) target = $region16
      $region15: #{tpu_custom_call.1} parent=5 // pred_region
        // Predicated region
        $region17: #{tpu_custom_call.1} parent=15 // pred_check
          %p108 = pneg %p31
        $region18: #{tpu_custom_call.1} parent=15 // pred_check_branch
          %110 = sbr.rel (%p108) target = $region20
        $region19: #{tpu_custom_call.1} parent=15 // pred_region
          %s111 = smul.u32 4, %s11
          %p112 = scmp.lt.s32.totalorder %s111, 7
          %s113 = scalar_select %p112, %s111, 7
          %s114 = smul.addr %s113, 3
          %s115 = smul.addr %s114, 8
          %s116 = scalar_lea.vmem %s0, %s115
          %s117 = smul.u32 4, %s11
        $region20: #{tpu_custom_call.1} parent=15 // pred_fallthru
          _
        // Predicated region
        $region21: #{tpu_custom_call.1} parent=15 // pred_check
          %p118 = pneg %p57
        $region22: #{tpu_custom_call.1} parent=15 // pred_check_branch
          %120 = sbr.rel (%p118) target = $region24
        $region23: #{tpu_custom_call.1} parent=15 // pred_region
          %s121 = smul.u32 4, %s11
          %p122 = scmp.lt.s32.totalorder %s121, 7
          %s123 = scalar_select %p122, %s121, 7
          %s124 = smul.addr %s123, 3
          %s125 = smul.addr %s124, 8
          %s126 = scalar_lea.vmem %s1, %s125
          %s127 = smul.u32 4, %s11
        $region24: #{tpu_custom_call.1} parent=15 // pred_fallthru
          _
      $region16: #{tpu_custom_call.1} parent=5 // pred_fallthru
        _
      %p128 = scmp.le.s32.totalorder 1, %s11
      %p129 = scmp.lt.s32.totalorder %s11, 3
      %p130 = pnand %p128, %p129
      %p131 = pneg %p130
      // Predicated region
      $region25: #{tpu_custom_call.1} parent=5 // pred_check
        _
      $region26: #{tpu_custom_call.1} parent=5 // pred_check_branch
        %133 = sbr.rel (%p130) target = $region28
      $region27: #{tpu_custom_call.1} parent=5 // pred_region
        %s134 = ssub.s32 %s11, 1
        %s135 = smul.u32 4, %s16
        %p136 = scmp.lt.s32.totalorder %s135, 7
        %s137 = scalar_select %p136, %s135, 7
        %s138 = smul.addr %s137, 3
        %s139 = smul.addr %s138, 8
        %s140 = scalar_lea.vmem %s0, %s139
        %p141 = pneg %p37
        %p142 = pneg %p34
        %s143 = smul.u32 4, %s16
        %p144 = scmp.lt.s32.totalorder %s143, 7
        %s145 = scalar_select %p144, %s143, 7
        %s146 = smul.addr %s145, 3
        %s147 = smul.addr %s146, 8
        %s148 = scalar_lea.vmem %s1, %s147
        %p149 = pneg %p63
        %p150 = pneg %p60
        %p151 = pneg %p89
        %p152 = pneg %p86
        %s153 = sand.u32 %s76, 1
        %s154 = scalar_lea.sflag [#allocation3], %s153
        %s155 = sand.u32 %s76, 1
        %s156 = smul.addr %s155, 64
        %s157 = scalar_lea.vmem [#allocation2], %s156
        %s158 = smul.u32 4, %s16
        %p159 = scmp.lt.s32.totalorder %s158, 7
        %s160 = scalar_select %p159, %s158, 7
        %s161 = smul.addr %s160, 3
        %s162 = smul.addr %s161, 8
        %s163 = scalar_lea.vmem %s0, %s162
        %s164 = smul.u32 4, %s16
        %s165 = smul.u32 4, %s16
        %p166 = scmp.lt.s32.totalorder %s165, 7
        %s167 = scalar_select %p166, %s165, 7
        %s168 = smul.addr %s167, 3
        %s169 = smul.addr %s168, 8
        %s170 = scalar_lea.vmem %s1, %s169
        %s171 = smul.u32 4, %s16
        %s172 = smul.u32 4, %s16
        %v173 = vld [vmem:[%s163] sm:$0xff]
        %v174 = vld [vmem:[%s163 + $0x8] sm:$0xff]
        %v175 = vld [vmem:[%s163 + $0x10] sm:$0x3]
        %v176 = vld [vmem:[%s163 + $0x18] sm:$0xff]
        %v177 = vld [vmem:[%s163 + $0x20] sm:$0xff]
        %v178 = vld [vmem:[%s163 + $0x28] sm:$0x3]
        %v179 = vld [vmem:[%s163 + $0x30] sm:$0xff]
        %v180 = vld [vmem:[%s163 + $0x38] sm:$0xff]
        %v181 = vld [vmem:[%s163 + $0x40] sm:$0x3]
        %v182 = vld [vmem:[%s163 + $0x48] sm:$0xff]
        %v183 = vld [vmem:[%s163 + $0x50] sm:$0xff]
        %v184 = vld [vmem:[%s163 + $0x58] sm:$0x3]
        %v185 = vld [vmem:[%s170] sm:$0xff]
        %v186 = vld [vmem:[%s170 + $0x8] sm:$0xff]
        %v187 = vld [vmem:[%s170 + $0x10] sm:$0x3]
        %v188 = vld [vmem:[%s170 + $0x18] sm:$0xff]
        %v189 = vld [vmem:[%s170 + $0x20] sm:$0xff]
        %v190 = vld [vmem:[%s170 + $0x28] sm:$0x3]
        %v191 = vld [vmem:[%s170 + $0x30] sm:$0xff]
        %v192 = vld [vmem:[%s170 + $0x38] sm:$0xff]
        %v193 = vld [vmem:[%s170 + $0x40] sm:$0x3]
        %v194 = vld [vmem:[%s170 + $0x48] sm:$0xff]
        %v195 = vld [vmem:[%s170 + $0x50] sm:$0xff]
        %v196 = vld [vmem:[%s170 + $0x58] sm:$0x3]
        %209 = vrot.lane.b32.xlu0 %v173, 127
        %v210 = vpop.permute.xlu0 %209
        %211 = vrot.lane.b32.xlu0 %v174, 127
        %v212 = vpop.permute.xlu0 %211
        %213 = vrot.lane.b32.xlu0 %v175, 127
        %v214 = vpop.permute.xlu0 %213
        %215 = vrot.lane.b32.xlu0 %v176, 127
        %v216 = vpop.permute.xlu0 %215
        %217 = vrot.lane.b32.xlu0 %v177, 127
        %v218 = vpop.permute.xlu0 %217
        %219 = vrot.lane.b32.xlu0 %v178, 127
        %v220 = vpop.permute.xlu0 %219
        %221 = vrot.lane.b32.xlu0 %v179, 127
        %v222 = vpop.permute.xlu0 %221
        %223 = vrot.lane.b32.xlu0 %v180, 127
        %v224 = vpop.permute.xlu0 %223
        %225 = vrot.lane.b32.xlu0 %v181, 127
        %v226 = vpop.permute.xlu0 %225
        %227 = vrot.lane.b32.xlu0 %v182, 127
        %v228 = vpop.permute.xlu0 %227
        %229 = vrot.lane.b32.xlu0 %v183, 127
        %v230 = vpop.permute.xlu0 %229
        %231 = vrot.lane.b32.xlu0 %v184, 127
        %v232 = vpop.permute.xlu0 %231
        %v245 = vadd.f32 %v173, %v210
        %v246 = vadd.f32 %v174, %v212
        %v247 = vadd.f32 %v175, %v214
        %v248 = vadd.f32 %v176, %v216
        %v249 = vadd.f32 %v177, %v218
        %v250 = vadd.f32 %v178, %v220
        %v251 = vadd.f32 %v179, %v222
        %v252 = vadd.f32 %v180, %v224
        %v253 = vadd.f32 %v181, %v226
        %v254 = vadd.f32 %v182, %v228
        %v255 = vadd.f32 %v183, %v230
        %v256 = vadd.f32 %v184, %v232
        %257 = vrot.lane.b32.xlu0 %v173, 126
        %v258 = vpop.permute.xlu0 %257
        %259 = vrot.lane.b32.xlu0 %v174, 126
        %v260 = vpop.permute.xlu0 %259
        %261 = vrot.lane.b32.xlu0 %v175, 126
        %v262 = vpop.permute.xlu0 %261
        %263 = vrot.lane.b32.xlu0 %v176, 126
        %v264 = vpop.permute.xlu0 %263
        %265 = vrot.lane.b32.xlu0 %v177, 126
        %v266 = vpop.permute.xlu0 %265
        %267 = vrot.lane.b32.xlu0 %v178, 126
        %v268 = vpop.permute.xlu0 %267
        %269 = vrot.lane.b32.xlu0 %v179, 126
        %v270 = vpop.permute.xlu0 %269
        %271 = vrot.lane.b32.xlu0 %v180, 126
        %v272 = vpop.permute.xlu0 %271
        %273 = vrot.lane.b32.xlu0 %v181, 126
        %v274 = vpop.permute.xlu0 %273
        %275 = vrot.lane.b32.xlu0 %v182, 126
        %v276 = vpop.permute.xlu0 %275
        %277 = vrot.lane.b32.xlu0 %v183, 126
        %v278 = vpop.permute.xlu0 %277
        %279 = vrot.lane.b32.xlu0 %v184, 126
        %v280 = vpop.permute.xlu0 %279
        %v293 = vadd.f32 %v245, %v258
        %v294 = vadd.f32 %v246, %v260
        %v295 = vadd.f32 %v247, %v262
        %v296 = vadd.f32 %v248, %v264
        %v297 = vadd.f32 %v249, %v266
        %v298 = vadd.f32 %v250, %v268
        %v299 = vadd.f32 %v251, %v270
        %v300 = vadd.f32 %v252, %v272
        %v301 = vadd.f32 %v253, %v274
        %v302 = vadd.f32 %v254, %v276
        %v303 = vadd.f32 %v255, %v278
        %v304 = vadd.f32 %v256, %v280
        %vm317 = vcmask 1046528
        %v318 = vrot.slane %v293, 1
        %v319 = vrot.slane %v294, 1
        %v320 = vsel %vm317, %v318, %v319
        %v321 = vrot.slane %v295, 1
        %v322 = vsel %vm317, %v319, %v321
        %v323 = vrot.slane %v296, 1
        %v324 = vrot.slane %v297, 1
        %v325 = vsel %vm317, %v323, %v324
        %v326 = vrot.slane %v298, 1
        %v327 = vsel %vm317, %v324, %v326
        %v328 = vrot.slane %v299, 1
        %v329 = vrot.slane %v300, 1
        %v330 = vsel %vm317, %v328, %v329
        %v331 = vrot.slane %v301, 1
        %v332 = vsel %vm317, %v329, %v331
        %v333 = vrot.slane %v302, 1
        %v334 = vrot.slane %v303, 1
        %v335 = vsel %vm317, %v333, %v334
        %v336 = vrot.slane %v304, 1
        %v337 = vsel %vm317, %v334, %v336
        %v346 = vadd.f32 %v293, %v320
        %v347 = vadd.f32 %v294, %v322
        %v348 = vadd.f32 %v296, %v325
        %v349 = vadd.f32 %v297, %v327
        %v350 = vadd.f32 %v299, %v330
        %v351 = vadd.f32 %v300, %v332
        %v352 = vadd.f32 %v302, %v335
        %v353 = vadd.f32 %v303, %v337
        %vm354 = vcmask 1045504
        %v355 = vrot.slane %v293, 2
        %v356 = vrot.slane %v294, 2
        %v357 = vsel %vm354, %v355, %v356
        %v358 = vrot.slane %v295, 2
        %v359 = vsel %vm354, %v356, %v358
        %v360 = vrot.slane %v296, 2
        %v361 = vrot.slane %v297, 2
        %v362 = vsel %vm354, %v360, %v361
        %v363 = vrot.slane %v298, 2
        %v364 = vsel %vm354, %v361, %v363
        %v365 = vrot.slane %v299, 2
        %v366 = vrot.slane %v300, 2
        %v367 = vsel %vm354, %v365, %v366
        %v368 = vrot.slane %v301, 2
        %v369 = vsel %vm354, %v366, %v368
        %v370 = vrot.slane %v302, 2
        %v371 = vrot.slane %v303, 2
        %v372 = vsel %vm354, %v370, %v371
        %v373 = vrot.slane %v304, 2
        %v374 = vsel %vm354, %v371, %v373
        %v383 = vadd.f32 %v346, %v357
        %v384 = vadd.f32 %v347, %v359
        %v385 = vadd.f32 %v348, %v362
        %v386 = vadd.f32 %v349, %v364
        %v387 = vadd.f32 %v350, %v367
        %v388 = vadd.f32 %v351, %v369
        %v389 = vadd.f32 %v352, %v372
        %v390 = vadd.f32 %v353, %v374
        %403 = vrot.lane.b32.xlu0 %v185, 127
        %v404 = vpop.permute.xlu0 %403
        %405 = vrot.lane.b32.xlu0 %v186, 127
        %v406 = vpop.permute.xlu0 %405
        %407 = vrot.lane.b32.xlu0 %v187, 127
        %v408 = vpop.permute.xlu0 %407
        %409 = vrot.lane.b32.xlu0 %v188, 127
        %v410 = vpop.permute.xlu0 %409
        %411 = vrot.lane.b32.xlu0 %v189, 127
        %v412 = vpop.permute.xlu0 %411
        %413 = vrot.lane.b32.xlu0 %v190, 127
        %v414 = vpop.permute.xlu0 %413
        %415 = vrot.lane.b32.xlu0 %v191, 127
        %v416 = vpop.permute.xlu0 %415
        %417 = vrot.lane.b32.xlu0 %v192, 127
        %v418 = vpop.permute.xlu0 %417
        %419 = vrot.lane.b32.xlu0 %v193, 127
        %v420 = vpop.permute.xlu0 %419
        %421 = vrot.lane.b32.xlu0 %v194, 127
        %v422 = vpop.permute.xlu0 %421
        %423 = vrot.lane.b32.xlu0 %v195, 127
        %v424 = vpop.permute.xlu0 %423
        %425 = vrot.lane.b32.xlu0 %v196, 127
        %v426 = vpop.permute.xlu0 %425
        %v439 = vadd.f32 %v185, %v404
        %v440 = vadd.f32 %v186, %v406
        %v441 = vadd.f32 %v187, %v408
        %v442 = vadd.f32 %v188, %v410
        %v443 = vadd.f32 %v189, %v412
        %v444 = vadd.f32 %v190, %v414
        %v445 = vadd.f32 %v191, %v416
        %v446 = vadd.f32 %v192, %v418
        %v447 = vadd.f32 %v193, %v420
        %v448 = vadd.f32 %v194, %v422
        %v449 = vadd.f32 %v195, %v424
        %v450 = vadd.f32 %v196, %v426
        %451 = vrot.lane.b32.xlu0 %v185, 126
        %v452 = vpop.permute.xlu0 %451
        %453 = vrot.lane.b32.xlu0 %v186, 126
        %v454 = vpop.permute.xlu0 %453
        %455 = vrot.lane.b32.xlu0 %v187, 126
        %v456 = vpop.permute.xlu0 %455
        %457 = vrot.lane.b32.xlu0 %v188, 126
        %v458 = vpop.permute.xlu0 %457
        %459 = vrot.lane.b32.xlu0 %v189, 126
        %v460 = vpop.permute.xlu0 %459
        %461 = vrot.lane.b32.xlu0 %v190, 126
        %v462 = vpop.permute.xlu0 %461
        %463 = vrot.lane.b32.xlu0 %v191, 126
        %v464 = vpop.permute.xlu0 %463
        %465 = vrot.lane.b32.xlu0 %v192, 126
        %v466 = vpop.permute.xlu0 %465
        %467 = vrot.lane.b32.xlu0 %v193, 126
        %v468 = vpop.permute.xlu0 %467
        %469 = vrot.lane.b32.xlu0 %v194, 126
        %v470 = vpop.permute.xlu0 %469
        %471 = vrot.lane.b32.xlu0 %v195, 126
        %v472 = vpop.permute.xlu0 %471
        %473 = vrot.lane.b32.xlu0 %v196, 126
        %v474 = vpop.permute.xlu0 %473
        %v487 = vadd.f32 %v439, %v452
        %v488 = vadd.f32 %v440, %v454
        %v489 = vadd.f32 %v441, %v456
        %v490 = vadd.f32 %v442, %v458
        %v491 = vadd.f32 %v443, %v460
        %v492 = vadd.f32 %v444, %v462
        %v493 = vadd.f32 %v445, %v464
        %v494 = vadd.f32 %v446, %v466
        %v495 = vadd.f32 %v447, %v468
        %v496 = vadd.f32 %v448, %v470
        %v497 = vadd.f32 %v449, %v472
        %v498 = vadd.f32 %v450, %v474
        %v511 = vrot.slane %v487, 1
        %v512 = vrot.slane %v488, 1
        %v513 = vsel %vm317, %v511, %v512
        %v514 = vrot.slane %v489, 1
        %v515 = vsel %vm317, %v512, %v514
        %v516 = vrot.slane %v490, 1
        %v517 = vrot.slane %v491, 1
        %v518 = vsel %vm317, %v516, %v517
        %v519 = vrot.slane %v492, 1
        %v520 = vsel %vm317, %v517, %v519
        %v521 = vrot.slane %v493, 1
        %v522 = vrot.slane %v494, 1
        %v523 = vsel %vm317, %v521, %v522
        %v524 = vrot.slane %v495, 1
        %v525 = vsel %vm317, %v522, %v524
        %v526 = vrot.slane %v496, 1
        %v527 = vrot.slane %v497, 1
        %v528 = vsel %vm317, %v526, %v527
        %v529 = vrot.slane %v498, 1
        %v530 = vsel %vm317, %v527, %v529
        %v539 = vadd.f32 %v487, %v513
        %v540 = vadd.f32 %v488, %v515
        %v541 = vadd.f32 %v490, %v518
        %v542 = vadd.f32 %v491, %v520
        %v543 = vadd.f32 %v493, %v523
        %v544 = vadd.f32 %v494, %v525
        %v545 = vadd.f32 %v496, %v528
        %v546 = vadd.f32 %v497, %v530
        %v547 = vrot.slane %v487, 2
        %v548 = vrot.slane %v488, 2
        %v549 = vsel %vm354, %v547, %v548
        %v550 = vrot.slane %v489, 2
        %v551 = vsel %vm354, %v548, %v550
        %v552 = vrot.slane %v490, 2
        %v553 = vrot.slane %v491, 2
        %v554 = vsel %vm354, %v552, %v553
        %v555 = vrot.slane %v492, 2
        %v556 = vsel %vm354, %v553, %v555
        %v557 = vrot.slane %v493, 2
        %v558 = vrot.slane %v494, 2
        %v559 = vsel %vm354, %v557, %v558
        %v560 = vrot.slane %v495, 2
        %v561 = vsel %vm354, %v558, %v560
        %v562 = vrot.slane %v496, 2
        %v563 = vrot.slane %v497, 2
        %v564 = vsel %vm354, %v562, %v563
        %v565 = vrot.slane %v498, 2
        %v566 = vsel %vm354, %v563, %v565
        %v575 = vadd.f32 %v539, %v549
        %v576 = vadd.f32 %v540, %v551
        %v577 = vadd.f32 %v541, %v554
        %v578 = vadd.f32 %v542, %v556
        %v579 = vadd.f32 %v543, %v559
        %v580 = vadd.f32 %v544, %v561
        %v581 = vadd.f32 %v545, %v564
        %v582 = vadd.f32 %v546, %v566
        %v583 = vmul.f32 %v173, %v173
        %v584 = vmul.f32 %v174, %v174
        %v585 = vmul.f32 %v175, %v175
        %v586 = vmul.f32 %v176, %v176
        %v587 = vmul.f32 %v177, %v177
        %v588 = vmul.f32 %v178, %v178
        %v589 = vmul.f32 %v179, %v179
        %v590 = vmul.f32 %v180, %v180
        %v591 = vmul.f32 %v181, %v181
        %v592 = vmul.f32 %v182, %v182
        %v593 = vmul.f32 %v183, %v183
        %v594 = vmul.f32 %v184, %v184
        %607 = vrot.lane.b32.xlu0 %v583, 127
        %v608 = vpop.permute.xlu0 %607
        %609 = vrot.lane.b32.xlu0 %v584, 127
        %v610 = vpop.permute.xlu0 %609
        %611 = vrot.lane.b32.xlu0 %v585, 127
        %v612 = vpop.permute.xlu0 %611
        %613 = vrot.lane.b32.xlu0 %v586, 127
        %v614 = vpop.permute.xlu0 %613
        %615 = vrot.lane.b32.xlu0 %v587, 127
        %v616 = vpop.permute.xlu0 %615
        %617 = vrot.lane.b32.xlu0 %v588, 127
        %v618 = vpop.permute.xlu0 %617
        %619 = vrot.lane.b32.xlu0 %v589, 127
        %v620 = vpop.permute.xlu0 %619
        %621 = vrot.lane.b32.xlu0 %v590, 127
        %v622 = vpop.permute.xlu0 %621
        %623 = vrot.lane.b32.xlu0 %v591, 127
        %v624 = vpop.permute.xlu0 %623
        %625 = vrot.lane.b32.xlu0 %v592, 127
        %v626 = vpop.permute.xlu0 %625
        %627 = vrot.lane.b32.xlu0 %v593, 127
        %v628 = vpop.permute.xlu0 %627
        %629 = vrot.lane.b32.xlu0 %v594, 127
        %v630 = vpop.permute.xlu0 %629
        %v643 = vadd.f32 %v583, %v608
        %v644 = vadd.f32 %v584, %v610
        %v645 = vadd.f32 %v585, %v612
        %v646 = vadd.f32 %v586, %v614
        %v647 = vadd.f32 %v587, %v616
        %v648 = vadd.f32 %v588, %v618
        %v649 = vadd.f32 %v589, %v620
        %v650 = vadd.f32 %v590, %v622
        %v651 = vadd.f32 %v591, %v624
        %v652 = vadd.f32 %v592, %v626
        %v653 = vadd.f32 %v593, %v628
        %v654 = vadd.f32 %v594, %v630
        %655 = vrot.lane.b32.xlu0 %v583, 126
        %v656 = vpop.permute.xlu0 %655
        %657 = vrot.lane.b32.xlu0 %v584, 126
        %v658 = vpop.permute.xlu0 %657
        %659 = vrot.lane.b32.xlu0 %v585, 126
        %v660 = vpop.permute.xlu0 %659
        %661 = vrot.lane.b32.xlu0 %v586, 126
        %v662 = vpop.permute.xlu0 %661
        %663 = vrot.lane.b32.xlu0 %v587, 126
        %v664 = vpop.permute.xlu0 %663
        %665 = vrot.lane.b32.xlu0 %v588, 126
        %v666 = vpop.permute.xlu0 %665
        %667 = vrot.lane.b32.xlu0 %v589, 126
        %v668 = vpop.permute.xlu0 %667
        %669 = vrot.lane.b32.xlu0 %v590, 126
        %v670 = vpop.permute.xlu0 %669
        %671 = vrot.lane.b32.xlu0 %v591, 126
        %v672 = vpop.permute.xlu0 %671
        %673 = vrot.lane.b32.xlu0 %v592, 126
        %v674 = vpop.permute.xlu0 %673
        %675 = vrot.lane.b32.xlu0 %v593, 126
        %v676 = vpop.permute.xlu0 %675
        %677 = vrot.lane.b32.xlu0 %v594, 126
        %v678 = vpop.permute.xlu0 %677
        %v691 = vadd.f32 %v643, %v656
        %v692 = vadd.f32 %v644, %v658
        %v693 = vadd.f32 %v645, %v660
        %v694 = vadd.f32 %v646, %v662
        %v695 = vadd.f32 %v647, %v664
        %v696 = vadd.f32 %v648, %v666
        %v697 = vadd.f32 %v649, %v668
        %v698 = vadd.f32 %v650, %v670
        %v699 = vadd.f32 %v651, %v672
        %v700 = vadd.f32 %v652, %v674
        %v701 = vadd.f32 %v653, %v676
        %v702 = vadd.f32 %v654, %v678
        %v715 = vrot.slane %v691, 1
        %v716 = vrot.slane %v692, 1
        %v717 = vsel %vm317, %v715, %v716
        %v718 = vrot.slane %v693, 1
        %v719 = vsel %vm317, %v716, %v718
        %v720 = vrot.slane %v694, 1
        %v721 = vrot.slane %v695, 1
        %v722 = vsel %vm317, %v720, %v721
        %v723 = vrot.slane %v696, 1
        %v724 = vsel %vm317, %v721, %v723
        %v725 = vrot.slane %v697, 1
        %v726 = vrot.slane %v698, 1
        %v727 = vsel %vm317, %v725, %v726
        %v728 = vrot.slane %v699, 1
        %v729 = vsel %vm317, %v726, %v728
        %v730 = vrot.slane %v700, 1
        %v731 = vrot.slane %v701, 1
        %v732 = vsel %vm317, %v730, %v731
        %v733 = vrot.slane %v702, 1
        %v734 = vsel %vm317, %v731, %v733
        %v743 = vadd.f32 %v691, %v717
        %v744 = vadd.f32 %v692, %v719
        %v745 = vadd.f32 %v694, %v722
        %v746 = vadd.f32 %v695, %v724
        %v747 = vadd.f32 %v697, %v727
        %v748 = vadd.f32 %v698, %v729
        %v749 = vadd.f32 %v700, %v732
        %v750 = vadd.f32 %v701, %v734
        %v751 = vrot.slane %v691, 2
        %v752 = vrot.slane %v692, 2
        %v753 = vsel %vm354, %v751, %v752
        %v754 = vrot.slane %v693, 2
        %v755 = vsel %vm354, %v752, %v754
        %v756 = vrot.slane %v694, 2
        %v757 = vrot.slane %v695, 2
        %v758 = vsel %vm354, %v756, %v757
        %v759 = vrot.slane %v696, 2
        %v760 = vsel %vm354, %v757, %v759
        %v761 = vrot.slane %v697, 2
        %v762 = vrot.slane %v698, 2
        %v763 = vsel %vm354, %v761, %v762
        %v764 = vrot.slane %v699, 2
        %v765 = vsel %vm354, %v762, %v764
        %v766 = vrot.slane %v700, 2
        %v767 = vrot.slane %v701, 2
        %v768 = vsel %vm354, %v766, %v767
        %v769 = vrot.slane %v702, 2
        %v770 = vsel %vm354, %v767, %v769
        %v779 = vadd.f32 %v743, %v753
        %v780 = vadd.f32 %v744, %v755
        %v781 = vadd.f32 %v745, %v758
        %v782 = vadd.f32 %v746, %v760
        %v783 = vadd.f32 %v747, %v763
        %v784 = vadd.f32 %v748, %v765
        %v785 = vadd.f32 %v749, %v768
        %v786 = vadd.f32 %v750, %v770
        %v787 = vmul.f32 %v185, %v185
        %v788 = vmul.f32 %v186, %v186
        %v789 = vmul.f32 %v187, %v187
        %v790 = vmul.f32 %v188, %v188
        %v791 = vmul.f32 %v189, %v189
        %v792 = vmul.f32 %v190, %v190
        %v793 = vmul.f32 %v191, %v191
        %v794 = vmul.f32 %v192, %v192
        %v795 = vmul.f32 %v193, %v193
        %v796 = vmul.f32 %v194, %v194
        %v797 = vmul.f32 %v195, %v195
        %v798 = vmul.f32 %v196, %v196
        %811 = vrot.lane.b32.xlu0 %v787, 127
        %v812 = vpop.permute.xlu0 %811
        %813 = vrot.lane.b32.xlu0 %v788, 127
        %v814 = vpop.permute.xlu0 %813
        %815 = vrot.lane.b32.xlu0 %v789, 127
        %v816 = vpop.permute.xlu0 %815
        %817 = vrot.lane.b32.xlu0 %v790, 127
        %v818 = vpop.permute.xlu0 %817
        %819 = vrot.lane.b32.xlu0 %v791, 127
        %v820 = vpop.permute.xlu0 %819
        %821 = vrot.lane.b32.xlu0 %v792, 127
        %v822 = vpop.permute.xlu0 %821
        %823 = vrot.lane.b32.xlu0 %v793, 127
        %v824 = vpop.permute.xlu0 %823
        %825 = vrot.lane.b32.xlu0 %v794, 127
        %v826 = vpop.permute.xlu0 %825
        %827 = vrot.lane.b32.xlu0 %v795, 127
        %v828 = vpop.permute.xlu0 %827
        %829 = vrot.lane.b32.xlu0 %v796, 127
        %v830 = vpop.permute.xlu0 %829
        %831 = vrot.lane.b32.xlu0 %v797, 127
        %v832 = vpop.permute.xlu0 %831
        %833 = vrot.lane.b32.xlu0 %v798, 127
        %v834 = vpop.permute.xlu0 %833
        %v847 = vadd.f32 %v787, %v812
        %v848 = vadd.f32 %v788, %v814
        %v849 = vadd.f32 %v789, %v816
        %v850 = vadd.f32 %v790, %v818
        %v851 = vadd.f32 %v791, %v820
        %v852 = vadd.f32 %v792, %v822
        %v853 = vadd.f32 %v793, %v824
        %v854 = vadd.f32 %v794, %v826
        %v855 = vadd.f32 %v795, %v828
        %v856 = vadd.f32 %v796, %v830
        %v857 = vadd.f32 %v797, %v832
        %v858 = vadd.f32 %v798, %v834
        %859 = vrot.lane.b32.xlu0 %v787, 126
        %v860 = vpop.permute.xlu0 %859
        %861 = vrot.lane.b32.xlu0 %v788, 126
        %v862 = vpop.permute.xlu0 %861
        %863 = vrot.lane.b32.xlu0 %v789, 126
        %v864 = vpop.permute.xlu0 %863
        %865 = vrot.lane.b32.xlu0 %v790, 126
        %v866 = vpop.permute.xlu0 %865
        %867 = vrot.lane.b32.xlu0 %v791, 126
        %v868 = vpop.permute.xlu0 %867
        %869 = vrot.lane.b32.xlu0 %v792, 126
        %v870 = vpop.permute.xlu0 %869
        %871 = vrot.lane.b32.xlu0 %v793, 126
        %v872 = vpop.permute.xlu0 %871
        %873 = vrot.lane.b32.xlu0 %v794, 126
        %v874 = vpop.permute.xlu0 %873
        %875 = vrot.lane.b32.xlu0 %v795, 126
        %v876 = vpop.permute.xlu0 %875
        %877 = vrot.lane.b32.xlu0 %v796, 126
        %v878 = vpop.permute.xlu0 %877
        %879 = vrot.lane.b32.xlu0 %v797, 126
        %v880 = vpop.permute.xlu0 %879
        %881 = vrot.lane.b32.xlu0 %v798, 126
        %v882 = vpop.permute.xlu0 %881
        %v895 = vadd.f32 %v847, %v860
        %v896 = vadd.f32 %v848, %v862
        %v897 = vadd.f32 %v849, %v864
        %v898 = vadd.f32 %v850, %v866
        %v899 = vadd.f32 %v851, %v868
        %v900 = vadd.f32 %v852, %v870
        %v901 = vadd.f32 %v853, %v872
        %v902 = vadd.f32 %v854, %v874
        %v903 = vadd.f32 %v855, %v876
        %v904 = vadd.f32 %v856, %v878
        %v905 = vadd.f32 %v857, %v880
        %v906 = vadd.f32 %v858, %v882
        %v919 = vrot.slane %v895, 1
        %v920 = vrot.slane %v896, 1
        %v921 = vsel %vm317, %v919, %v920
        %v922 = vrot.slane %v897, 1
        %v923 = vsel %vm317, %v920, %v922
        %v924 = vrot.slane %v898, 1
        %v925 = vrot.slane %v899, 1
        %v926 = vsel %vm317, %v924, %v925
        %v927 = vrot.slane %v900, 1
        %v928 = vsel %vm317, %v925, %v927
        %v929 = vrot.slane %v901, 1
        %v930 = vrot.slane %v902, 1
        %v931 = vsel %vm317, %v929, %v930
        %v932 = vrot.slane %v903, 1
        %v933 = vsel %vm317, %v930, %v932
        %v934 = vrot.slane %v904, 1
        %v935 = vrot.slane %v905, 1
        %v936 = vsel %vm317, %v934, %v935
        %v937 = vrot.slane %v906, 1
        %v938 = vsel %vm317, %v935, %v937
        %v947 = vadd.f32 %v895, %v921
        %v948 = vadd.f32 %v896, %v923
        %v949 = vadd.f32 %v898, %v926
        %v950 = vadd.f32 %v899, %v928
        %v951 = vadd.f32 %v901, %v931
        %v952 = vadd.f32 %v902, %v933
        %v953 = vadd.f32 %v904, %v936
        %v954 = vadd.f32 %v905, %v938
        %v955 = vrot.slane %v895, 2
        %v956 = vrot.slane %v896, 2
        %v957 = vsel %vm354, %v955, %v956
        %v958 = vrot.slane %v897, 2
        %v959 = vsel %vm354, %v956, %v958
        %v960 = vrot.slane %v898, 2
        %v961 = vrot.slane %v899, 2
        %v962 = vsel %vm354, %v960, %v961
        %v963 = vrot.slane %v900, 2
        %v964 = vsel %vm354, %v961, %v963
        %v965 = vrot.slane %v901, 2
        %v966 = vrot.slane %v902, 2
        %v967 = vsel %vm354, %v965, %v966
        %v968 = vrot.slane %v903, 2
        %v969 = vsel %vm354, %v966, %v968
        %v970 = vrot.slane %v904, 2
        %v971 = vrot.slane %v905, 2
        %v972 = vsel %vm354, %v970, %v971
        %v973 = vrot.slane %v906, 2
        %v974 = vsel %vm354, %v971, %v973
        %v983 = vadd.f32 %v947, %v957
        %v984 = vadd.f32 %v948, %v959
        %v985 = vadd.f32 %v949, %v962
        %v986 = vadd.f32 %v950, %v964
        %v987 = vadd.f32 %v951, %v967
        %v988 = vadd.f32 %v952, %v969
        %v989 = vadd.f32 %v953, %v972
        %v990 = vadd.f32 %v954, %v974
        %v991 = vmul.f32 %v173, %v185
        %v992 = vmul.f32 %v174, %v186
        %v993 = vmul.f32 %v175, %v187
        %v994 = vmul.f32 %v176, %v188
        %v995 = vmul.f32 %v177, %v189
        %v996 = vmul.f32 %v178, %v190
        %v997 = vmul.f32 %v179, %v191
        %v998 = vmul.f32 %v180, %v192
        %v999 = vmul.f32 %v181, %v193
        %v1000 = vmul.f32 %v182, %v194
        %v1001 = vmul.f32 %v183, %v195
        %v1002 = vmul.f32 %v184, %v196
        %1015 = vrot.lane.b32.xlu0 %v991, 127
        %v1016 = vpop.permute.xlu0 %1015
        %1017 = vrot.lane.b32.xlu0 %v992, 127
        %v1018 = vpop.permute.xlu0 %1017
        %1019 = vrot.lane.b32.xlu0 %v993, 127
        %v1020 = vpop.permute.xlu0 %1019
        %1021 = vrot.lane.b32.xlu0 %v994, 127
        %v1022 = vpop.permute.xlu0 %1021
        %1023 = vrot.lane.b32.xlu0 %v995, 127
        %v1024 = vpop.permute.xlu0 %1023
        %1025 = vrot.lane.b32.xlu0 %v996, 127
        %v1026 = vpop.permute.xlu0 %1025
        %1027 = vrot.lane.b32.xlu0 %v997, 127
        %v1028 = vpop.permute.xlu0 %1027
        %1029 = vrot.lane.b32.xlu0 %v998, 127
        %v1030 = vpop.permute.xlu0 %1029
        %1031 = vrot.lane.b32.xlu0 %v999, 127
        %v1032 = vpop.permute.xlu0 %1031
        %1033 = vrot.lane.b32.xlu0 %v1000, 127
        %v1034 = vpop.permute.xlu0 %1033
        %1035 = vrot.lane.b32.xlu0 %v1001, 127
        %v1036 = vpop.permute.xlu0 %1035
        %1037 = vrot.lane.b32.xlu0 %v1002, 127
        %v1038 = vpop.permute.xlu0 %1037
        %v1051 = vadd.f32 %v991, %v1016
        %v1052 = vadd.f32 %v992, %v1018
        %v1053 = vadd.f32 %v993, %v1020
        %v1054 = vadd.f32 %v994, %v1022
        %v1055 = vadd.f32 %v995, %v1024
        %v1056 = vadd.f32 %v996, %v1026
        %v1057 = vadd.f32 %v997, %v1028
        %v1058 = vadd.f32 %v998, %v1030
        %v1059 = vadd.f32 %v999, %v1032
        %v1060 = vadd.f32 %v1000, %v1034
        %v1061 = vadd.f32 %v1001, %v1036
        %v1062 = vadd.f32 %v1002, %v1038
        %1063 = vrot.lane.b32.xlu0 %v991, 126
        %v1064 = vpop.permute.xlu0 %1063
        %1065 = vrot.lane.b32.xlu0 %v992, 126
        %v1066 = vpop.permute.xlu0 %1065
        %1067 = vrot.lane.b32.xlu0 %v993, 126
        %v1068 = vpop.permute.xlu0 %1067
        %1069 = vrot.lane.b32.xlu0 %v994, 126
        %v1070 = vpop.permute.xlu0 %1069
        %1071 = vrot.lane.b32.xlu0 %v995, 126
        %v1072 = vpop.permute.xlu0 %1071
        %1073 = vrot.lane.b32.xlu0 %v996, 126
        %v1074 = vpop.permute.xlu0 %1073
        %1075 = vrot.lane.b32.xlu0 %v997, 126
        %v1076 = vpop.permute.xlu0 %1075
        %1077 = vrot.lane.b32.xlu0 %v998, 126
        %v1078 = vpop.permute.xlu0 %1077
        %1079 = vrot.lane.b32.xlu0 %v999, 126
        %v1080 = vpop.permute.xlu0 %1079
        %1081 = vrot.lane.b32.xlu0 %v1000, 126
        %v1082 = vpop.permute.xlu0 %1081
        %1083 = vrot.lane.b32.xlu0 %v1001, 126
        %v1084 = vpop.permute.xlu0 %1083
        %1085 = vrot.lane.b32.xlu0 %v1002, 126
        %v1086 = vpop.permute.xlu0 %1085
        %v1099 = vadd.f32 %v1051, %v1064
        %v1100 = vadd.f32 %v1052, %v1066
        %v1101 = vadd.f32 %v1053, %v1068
        %v1102 = vadd.f32 %v1054, %v1070
        %v1103 = vadd.f32 %v1055, %v1072
        %v1104 = vadd.f32 %v1056, %v1074
        %v1105 = vadd.f32 %v1057, %v1076
        %v1106 = vadd.f32 %v1058, %v1078
        %v1107 = vadd.f32 %v1059, %v1080
        %v1108 = vadd.f32 %v1060, %v1082
        %v1109 = vadd.f32 %v1061, %v1084
        %v1110 = vadd.f32 %v1062, %v1086
        %v1123 = vrot.slane %v1099, 1
        %v1124 = vrot.slane %v1100, 1
        %v1125 = vsel %vm317, %v1123, %v1124
        %v1126 = vrot.slane %v1101, 1
        %v1127 = vsel %vm317, %v1124, %v1126
        %v1128 = vrot.slane %v1102, 1
        %v1129 = vrot.slane %v1103, 1
        %v1130 = vsel %vm317, %v1128, %v1129
        %v1131 = vrot.slane %v1104, 1
        %v1132 = vsel %vm317, %v1129, %v1131
        %v1133 = vrot.slane %v1105, 1
        %v1134 = vrot.slane %v1106, 1
        %v1135 = vsel %vm317, %v1133, %v1134
        %v1136 = vrot.slane %v1107, 1
        %v1137 = vsel %vm317, %v1134, %v1136
        %v1138 = vrot.slane %v1108, 1
        %v1139 = vrot.slane %v1109, 1
        %v1140 = vsel %vm317, %v1138, %v1139
        %v1141 = vrot.slane %v1110, 1
        %v1142 = vsel %vm317, %v1139, %v1141
        %v1151 = vadd.f32 %v1099, %v1125
        %v1152 = vadd.f32 %v1100, %v1127
        %v1153 = vadd.f32 %v1102, %v1130
        %v1154 = vadd.f32 %v1103, %v1132
        %v1155 = vadd.f32 %v1105, %v1135
        %v1156 = vadd.f32 %v1106, %v1137
        %v1157 = vadd.f32 %v1108, %v1140
        %v1158 = vadd.f32 %v1109, %v1142
        %v1159 = vrot.slane %v1099, 2
        %v1160 = vrot.slane %v1100, 2
        %v1161 = vsel %vm354, %v1159, %v1160
        %v1162 = vrot.slane %v1101, 2
        %v1163 = vsel %vm354, %v1160, %v1162
        %v1164 = vrot.slane %v1102, 2
        %v1165 = vrot.slane %v1103, 2
        %v1166 = vsel %vm354, %v1164, %v1165
        %v1167 = vrot.slane %v1104, 2
        %v1168 = vsel %vm354, %v1165, %v1167
        %v1169 = vrot.slane %v1105, 2
        %v1170 = vrot.slane %v1106, 2
        %v1171 = vsel %vm354, %v1169, %v1170
        %v1172 = vrot.slane %v1107, 2
        %v1173 = vsel %vm354, %v1170, %v1172
        %v1174 = vrot.slane %v1108, 2
        %v1175 = vrot.slane %v1109, 2
        %v1176 = vsel %vm354, %v1174, %v1175
        %v1177 = vrot.slane %v1110, 2
        %v1178 = vsel %vm354, %v1175, %v1177
        %v1187 = vadd.f32 %v1151, %v1161
        %v1188 = vadd.f32 %v1152, %v1163
        %v1189 = vadd.f32 %v1153, %v1166
        %v1190 = vadd.f32 %v1154, %v1168
        %v1191 = vadd.f32 %v1155, %v1171
        %v1192 = vadd.f32 %v1156, %v1173
        %v1193 = vadd.f32 %v1157, %v1176
        %v1194 = vadd.f32 %v1158, %v1178
        %v1195 = vmul.f32 %v383, 0.11111111
        %v1196 = vmul.f32 %v384, 0.11111111
        %v1197 = vmul.f32 %v385, 0.11111111
        %v1198 = vmul.f32 %v386, 0.11111111
        %v1199 = vmul.f32 %v387, 0.11111111
        %v1200 = vmul.f32 %v388, 0.11111111
        %v1201 = vmul.f32 %v389, 0.11111111
        %v1202 = vmul.f32 %v390, 0.11111111
        %v1203 = vmul.f32 %v575, 0.11111111
        %v1204 = vmul.f32 %v576, 0.11111111
        %v1205 = vmul.f32 %v577, 0.11111111
        %v1206 = vmul.f32 %v578, 0.11111111
        %v1207 = vmul.f32 %v579, 0.11111111
        %v1208 = vmul.f32 %v580, 0.11111111
        %v1209 = vmul.f32 %v581, 0.11111111
        %v1210 = vmul.f32 %v582, 0.11111111
        %v1211 = vmul.f32 %v779, 0.11111111
        %v1212 = vmul.f32 %v780, 0.11111111
        %v1213 = vmul.f32 %v781, 0.11111111
        %v1214 = vmul.f32 %v782, 0.11111111
        %v1215 = vmul.f32 %v783, 0.11111111
        %v1216 = vmul.f32 %v784, 0.11111111
        %v1217 = vmul.f32 %v785, 0.11111111
        %v1218 = vmul.f32 %v786, 0.11111111
        %v1219 = vmul.f32 %v1195, %v1195
        %v1220 = vmul.f32 %v1196, %v1196
        %v1221 = vmul.f32 %v1197, %v1197
        %v1222 = vmul.f32 %v1198, %v1198
        %v1223 = vmul.f32 %v1199, %v1199
        %v1224 = vmul.f32 %v1200, %v1200
        %v1225 = vmul.f32 %v1201, %v1201
        %v1226 = vmul.f32 %v1202, %v1202
        %v1227 = vsub.f32 %v1211, %v1219
        %v1228 = vsub.f32 %v1212, %v1220
        %v1229 = vsub.f32 %v1213, %v1221
        %v1230 = vsub.f32 %v1214, %v1222
        %v1231 = vsub.f32 %v1215, %v1223
        %v1232 = vsub.f32 %v1216, %v1224
        %v1233 = vsub.f32 %v1217, %v1225
        %v1234 = vsub.f32 %v1218, %v1226
        %v1235 = vmul.f32 %v983, 0.11111111
        %v1236 = vmul.f32 %v984, 0.11111111
        %v1237 = vmul.f32 %v985, 0.11111111
        %v1238 = vmul.f32 %v986, 0.11111111
        %v1239 = vmul.f32 %v987, 0.11111111
        %v1240 = vmul.f32 %v988, 0.11111111
        %v1241 = vmul.f32 %v989, 0.11111111
        %v1242 = vmul.f32 %v990, 0.11111111
        %v1243 = vmul.f32 %v1203, %v1203
        %v1244 = vmul.f32 %v1204, %v1204
        %v1245 = vmul.f32 %v1205, %v1205
        %v1246 = vmul.f32 %v1206, %v1206
        %v1247 = vmul.f32 %v1207, %v1207
        %v1248 = vmul.f32 %v1208, %v1208
        %v1249 = vmul.f32 %v1209, %v1209
        %v1250 = vmul.f32 %v1210, %v1210
        %v1251 = vsub.f32 %v1235, %v1243
        %v1252 = vsub.f32 %v1236, %v1244
        %v1253 = vsub.f32 %v1237, %v1245
        %v1254 = vsub.f32 %v1238, %v1246
        %v1255 = vsub.f32 %v1239, %v1247
        %v1256 = vsub.f32 %v1240, %v1248
        %v1257 = vsub.f32 %v1241, %v1249
        %v1258 = vsub.f32 %v1242, %v1250
        %v1259 = vmul.f32 %v1187, 0.11111111
        %v1260 = vmul.f32 %v1188, 0.11111111
        %v1261 = vmul.f32 %v1189, 0.11111111
        %v1262 = vmul.f32 %v1190, 0.11111111
        %v1263 = vmul.f32 %v1191, 0.11111111
        %v1264 = vmul.f32 %v1192, 0.11111111
        %v1265 = vmul.f32 %v1193, 0.11111111
        %v1266 = vmul.f32 %v1194, 0.11111111
        %v1267 = vmul.f32 %v1195, %v1203
        %v1268 = vmul.f32 %v1196, %v1204
        %v1269 = vmul.f32 %v1197, %v1205
        %v1270 = vmul.f32 %v1198, %v1206
        %v1271 = vmul.f32 %v1199, %v1207
        %v1272 = vmul.f32 %v1200, %v1208
        %v1273 = vmul.f32 %v1201, %v1209
        %v1274 = vmul.f32 %v1202, %v1210
        %v1275 = vsub.f32 %v1259, %v1267
        %v1276 = vsub.f32 %v1260, %v1268
        %v1277 = vsub.f32 %v1261, %v1269
        %v1278 = vsub.f32 %v1262, %v1270
        %v1279 = vsub.f32 %v1263, %v1271
        %v1280 = vsub.f32 %v1264, %v1272
        %v1281 = vsub.f32 %v1265, %v1273
        %v1282 = vsub.f32 %v1266, %v1274
        %v1283 = vmul.f32 %v1195, 2.0
        %v1284 = vmul.f32 %v1196, 2.0
        %v1285 = vmul.f32 %v1197, 2.0
        %v1286 = vmul.f32 %v1198, 2.0
        %v1287 = vmul.f32 %v1199, 2.0
        %v1288 = vmul.f32 %v1200, 2.0
        %v1289 = vmul.f32 %v1201, 2.0
        %v1290 = vmul.f32 %v1202, 2.0
        %v1291 = vmul.f32 %v1283, %v1203
        %v1292 = vmul.f32 %v1284, %v1204
        %v1293 = vmul.f32 %v1285, %v1205
        %v1294 = vmul.f32 %v1286, %v1206
        %v1295 = vmul.f32 %v1287, %v1207
        %v1296 = vmul.f32 %v1288, %v1208
        %v1297 = vmul.f32 %v1289, %v1209
        %v1298 = vmul.f32 %v1290, %v1210
        %v1299 = vadd.f32 %v1291, 0.0001
        %v1300 = vadd.f32 %v1292, 0.0001
        %v1301 = vadd.f32 %v1293, 0.0001
        %v1302 = vadd.f32 %v1294, 0.0001
        %v1303 = vadd.f32 %v1295, 0.0001
        %v1304 = vadd.f32 %v1296, 0.0001
        %v1305 = vadd.f32 %v1297, 0.0001
        %v1306 = vadd.f32 %v1298, 0.0001
        %v1307 = vmul.f32 %v1275, 2.0
        %v1308 = vmul.f32 %v1276, 2.0
        %v1309 = vmul.f32 %v1277, 2.0
        %v1310 = vmul.f32 %v1278, 2.0
        %v1311 = vmul.f32 %v1279, 2.0
        %v1312 = vmul.f32 %v1280, 2.0
        %v1313 = vmul.f32 %v1281, 2.0
        %v1314 = vmul.f32 %v1282, 2.0
        %v1315 = vadd.f32 %v1307, 0.0009
        %v1316 = vadd.f32 %v1308, 0.0009
        %v1317 = vadd.f32 %v1309, 0.0009
        %v1318 = vadd.f32 %v1310, 0.0009
        %v1319 = vadd.f32 %v1311, 0.0009
        %v1320 = vadd.f32 %v1312, 0.0009
        %v1321 = vadd.f32 %v1313, 0.0009
        %v1322 = vadd.f32 %v1314, 0.0009
        %v1323 = vmul.f32 %v1299, %v1315
        %v1324 = vmul.f32 %v1300, %v1316
        %v1325 = vmul.f32 %v1301, %v1317
        %v1326 = vmul.f32 %v1302, %v1318
        %v1327 = vmul.f32 %v1303, %v1319
        %v1328 = vmul.f32 %v1304, %v1320
        %v1329 = vmul.f32 %v1305, %v1321
        %v1330 = vmul.f32 %v1306, %v1322
        %v1331 = vadd.f32 %v1219, %v1243
        %v1332 = vadd.f32 %v1220, %v1244
        %v1333 = vadd.f32 %v1221, %v1245
        %v1334 = vadd.f32 %v1222, %v1246
        %v1335 = vadd.f32 %v1223, %v1247
        %v1336 = vadd.f32 %v1224, %v1248
        %v1337 = vadd.f32 %v1225, %v1249
        %v1338 = vadd.f32 %v1226, %v1250
        %v1339 = vadd.f32 %v1331, 0.0001
        %v1340 = vadd.f32 %v1332, 0.0001
        %v1341 = vadd.f32 %v1333, 0.0001
        %v1342 = vadd.f32 %v1334, 0.0001
        %v1343 = vadd.f32 %v1335, 0.0001
        %v1344 = vadd.f32 %v1336, 0.0001
        %v1345 = vadd.f32 %v1337, 0.0001
        %v1346 = vadd.f32 %v1338, 0.0001
        %v1347 = vadd.f32 %v1227, %v1251
        %v1348 = vadd.f32 %v1228, %v1252
        %v1349 = vadd.f32 %v1229, %v1253
        %v1350 = vadd.f32 %v1230, %v1254
        %v1351 = vadd.f32 %v1231, %v1255
        %v1352 = vadd.f32 %v1232, %v1256
        %v1353 = vadd.f32 %v1233, %v1257
        %v1354 = vadd.f32 %v1234, %v1258
        %v1355 = vadd.f32 %v1347, 0.0009
        %v1356 = vadd.f32 %v1348, 0.0009
        %v1357 = vadd.f32 %v1349, 0.0009
        %v1358 = vadd.f32 %v1350, 0.0009
        %v1359 = vadd.f32 %v1351, 0.0009
        %v1360 = vadd.f32 %v1352, 0.0009
        %v1361 = vadd.f32 %v1353, 0.0009
        %v1362 = vadd.f32 %v1354, 0.0009
        %v1363 = vmul.f32 %v1339, %v1355
        %v1364 = vmul.f32 %v1340, %v1356
        %v1365 = vmul.f32 %v1341, %v1357
        %v1366 = vmul.f32 %v1342, %v1358
        %v1367 = vmul.f32 %v1343, %v1359
        %v1368 = vmul.f32 %v1344, %v1360
        %v1369 = vmul.f32 %v1345, %v1361
        %v1370 = vmul.f32 %v1346, %v1362
        %v1371 = vrcp.pop %v1363
        %v1372 = vmul.f32 %v1363, %v1371
        %v1373 = vsub.f32 1.0, %v1372
        %v1374 = vmul.f32 %v1371, %v1373
        %v1375 = vadd.f32 %v1371, %v1374
        %vm1376 = vweird.f32 %v1363
        %vm1377 = vweird.f32 %v1371
        %vm1378 = vmor %vm1376, %vm1377
        %v1379 = vsel %vm1378, %v1371, %v1375
        %v1380 = vand.u32 2147483647, %v1363
        %vm1381 = vcmp.eq.f32.partialorder %v1380, 8.507059e+37
        %v1382 = vand.u32 %v1363, 2147483648
        %v1383 = vor.u32 1.1754944e-38, %v1382
        %v1384 = vsel %vm1381, %v1383, %v1379
        %v1385 = vmul.f32 %v1323, %v1384
        %v1386 = vrcp.pop %v1364
        %v1387 = vmul.f32 %v1364, %v1386
        %v1388 = vsub.f32 1.0, %v1387
        %v1389 = vmul.f32 %v1386, %v1388
        %v1390 = vadd.f32 %v1386, %v1389
        %vm1391 = vweird.f32 %v1364
        %vm1392 = vweird.f32 %v1386
        %vm1393 = vmor %vm1391, %vm1392
        %v1394 = vsel %vm1393, %v1386, %v1390
        %v1395 = vand.u32 2147483647, %v1364
        %vm1396 = vcmp.eq.f32.partialorder %v1395, 8.507059e+37
        %v1397 = vand.u32 %v1364, 2147483648
        %v1398 = vor.u32 1.1754944e-38, %v1397
        %v1399 = vsel %vm1396, %v1398, %v1394
        %v1400 = vmul.f32 %v1324, %v1399
        %v1401 = vrcp.pop %v1365
        %v1402 = vmul.f32 %v1365, %v1401
        %v1403 = vsub.f32 1.0, %v1402
        %v1404 = vmul.f32 %v1401, %v1403
        %v1405 = vadd.f32 %v1401, %v1404
        %vm1406 = vweird.f32 %v1365
        %vm1407 = vweird.f32 %v1401
        %vm1408 = vmor %vm1406, %vm1407
        %v1409 = vsel %vm1408, %v1401, %v1405
        %v1410 = vand.u32 2147483647, %v1365
        %vm1411 = vcmp.eq.f32.partialorder %v1410, 8.507059e+37
        %v1412 = vand.u32 %v1365, 2147483648
        %v1413 = vor.u32 1.1754944e-38, %v1412
        %v1414 = vsel %vm1411, %v1413, %v1409
        %v1415 = vmul.f32 %v1325, %v1414
        %v1416 = vrcp.pop %v1366
        %v1417 = vmul.f32 %v1366, %v1416
        %v1418 = vsub.f32 1.0, %v1417
        %v1419 = vmul.f32 %v1416, %v1418
        %v1420 = vadd.f32 %v1416, %v1419
        %vm1421 = vweird.f32 %v1366
        %vm1422 = vweird.f32 %v1416
        %vm1423 = vmor %vm1421, %vm1422
        %v1424 = vsel %vm1423, %v1416, %v1420
        %v1425 = vand.u32 2147483647, %v1366
        %vm1426 = vcmp.eq.f32.partialorder %v1425, 8.507059e+37
        %v1427 = vand.u32 %v1366, 2147483648
        %v1428 = vor.u32 1.1754944e-38, %v1427
        %v1429 = vsel %vm1426, %v1428, %v1424
        %v1430 = vmul.f32 %v1326, %v1429
        %v1431 = vrcp.pop %v1367
        %v1432 = vmul.f32 %v1367, %v1431
        %v1433 = vsub.f32 1.0, %v1432
        %v1434 = vmul.f32 %v1431, %v1433
        %v1435 = vadd.f32 %v1431, %v1434
        %vm1436 = vweird.f32 %v1367
        %vm1437 = vweird.f32 %v1431
        %vm1438 = vmor %vm1436, %vm1437
        %v1439 = vsel %vm1438, %v1431, %v1435
        %v1440 = vand.u32 2147483647, %v1367
        %vm1441 = vcmp.eq.f32.partialorder %v1440, 8.507059e+37
        %v1442 = vand.u32 %v1367, 2147483648
        %v1443 = vor.u32 1.1754944e-38, %v1442
        %v1444 = vsel %vm1441, %v1443, %v1439
        %v1445 = vmul.f32 %v1327, %v1444
        %v1446 = vrcp.pop %v1368
        %v1447 = vmul.f32 %v1368, %v1446
        %v1448 = vsub.f32 1.0, %v1447
        %v1449 = vmul.f32 %v1446, %v1448
        %v1450 = vadd.f32 %v1446, %v1449
        %vm1451 = vweird.f32 %v1368
        %vm1452 = vweird.f32 %v1446
        %vm1453 = vmor %vm1451, %vm1452
        %v1454 = vsel %vm1453, %v1446, %v1450
        %v1455 = vand.u32 2147483647, %v1368
        %vm1456 = vcmp.eq.f32.partialorder %v1455, 8.507059e+37
        %v1457 = vand.u32 %v1368, 2147483648
        %v1458 = vor.u32 1.1754944e-38, %v1457
        %v1459 = vsel %vm1456, %v1458, %v1454
        %v1460 = vmul.f32 %v1328, %v1459
        %v1461 = vrcp.pop %v1369
        %v1462 = vmul.f32 %v1369, %v1461
        %v1463 = vsub.f32 1.0, %v1462
        %v1464 = vmul.f32 %v1461, %v1463
        %v1465 = vadd.f32 %v1461, %v1464
        %vm1466 = vweird.f32 %v1369
        %vm1467 = vweird.f32 %v1461
        %vm1468 = vmor %vm1466, %vm1467
        %v1469 = vsel %vm1468, %v1461, %v1465
        %v1470 = vand.u32 2147483647, %v1369
        %vm1471 = vcmp.eq.f32.partialorder %v1470, 8.507059e+37
        %v1472 = vand.u32 %v1369, 2147483648
        %v1473 = vor.u32 1.1754944e-38, %v1472
        %v1474 = vsel %vm1471, %v1473, %v1469
        %v1475 = vmul.f32 %v1329, %v1474
        %v1476 = vrcp.pop %v1370
        %v1477 = vmul.f32 %v1370, %v1476
        %v1478 = vsub.f32 1.0, %v1477
        %v1479 = vmul.f32 %v1476, %v1478
        %v1480 = vadd.f32 %v1476, %v1479
        %vm1481 = vweird.f32 %v1370
        %vm1482 = vweird.f32 %v1476
        %vm1483 = vmor %vm1481, %vm1482
        %v1484 = vsel %vm1483, %v1476, %v1480
        %v1485 = vand.u32 2147483647, %v1370
        %vm1486 = vcmp.eq.f32.partialorder %v1485, 8.507059e+37
        %v1487 = vand.u32 %v1370, 2147483648
        %v1488 = vor.u32 1.1754944e-38, %v1487
        %v1489 = vsel %vm1486, %v1488, %v1484
        %v1490 = vmul.f32 %v1330, %v1489
        %v1491 = vsub.f32 1.0, %v1385
        %v1492 = vsub.f32 1.0, %v1400
        %v1493 = vsub.f32 1.0, %v1415
        %v1494 = vsub.f32 1.0, %v1430
        %v1495 = vsub.f32 1.0, %v1445
        %v1496 = vsub.f32 1.0, %v1460
        %v1497 = vsub.f32 1.0, %v1475
        %v1498 = vsub.f32 1.0, %v1490
        %v1499 = vmul.f32 %v1491, 0.5
        %v1500 = vmul.f32 %v1492, 0.5
        %v1501 = vmul.f32 %v1493, 0.5
        %v1502 = vmul.f32 %v1494, 0.5
        %v1503 = vmul.f32 %v1495, 0.5
        %v1504 = vmul.f32 %v1496, 0.5
        %v1505 = vmul.f32 %v1497, 0.5
        %v1506 = vmul.f32 %v1498, 0.5
        %v1507 = vmax.f32 %v1499, 0.0
        %v1508 = vmax.f32 %v1500, 0.0
        %v1509 = vmax.f32 %v1501, 0.0
        %v1510 = vmax.f32 %v1502, 0.0
        %v1511 = vmax.f32 %v1503, 0.0
        %v1512 = vmax.f32 %v1504, 0.0
        %v1513 = vmax.f32 %v1505, 0.0
        %v1514 = vmax.f32 %v1506, 0.0
        %v1515 = vmin.f32 %v1507, 1.0
        %v1516 = vmin.f32 %v1508, 1.0
        %v1517 = vmin.f32 %v1509, 1.0
        %v1518 = vmin.f32 %v1510, 1.0
        %v1519 = vmin.f32 %v1511, 1.0
        %v1520 = vmin.f32 %v1512, 1.0
        %v1521 = vmin.f32 %v1513, 1.0
        %v1522 = vmin.f32 %v1514, 1.0
        %vm1523 = vcmask 130048
        %1524 = vst.msk [vmem:[%s157] sm:$0xff] %vm1523, %v1515
        %1525 = vst.msk [vmem:[%s157 + $0x8] sm:$0xff] %vm1523, %v1516
        %1526 = vst.msk [vmem:[%s157 + $0x10] sm:$0xff] %vm1523, %v1517
        %1527 = vst.msk [vmem:[%s157 + $0x18] sm:$0xff] %vm1523, %v1518
        %1528 = vst.msk [vmem:[%s157 + $0x20] sm:$0xff] %vm1523, %v1519
        %1529 = vst.msk [vmem:[%s157 + $0x28] sm:$0xff] %vm1523, %v1520
        %1530 = vst.msk [vmem:[%s157 + $0x30] sm:$0xff] %vm1523, %v1521
        %1531 = vst.msk [vmem:[%s157 + $0x38] sm:$0xff] %vm1523, %v1522
        %s1532 = sand.u32 %s76, 1
        %s1533 = scalar_lea.sflag [#allocation3], %s1532
        %s1534 = sand.u32 %s76, 1
        %s1535 = smul.addr %s1534, 64
        %s1536 = scalar_lea.vmem [#allocation2], %s1535
        // Predicated region
        $region29: #{tpu_custom_call.1} parent=27 // pred_check
          %p1537 = pneg %p86
        $region30: #{tpu_custom_call.1} parent=27 // pred_check_branch
          %1539 = sbr.rel (%p1537) target = $region32
        $region31: #{tpu_custom_call.1} parent=27 // pred_region
          %s1540 = smul.u32 4, %s16
          %1542 = vsyncadd %s1533, 0
          %s1543 = smul.addr %s1540, 2
          %s1544 = smul.addr %s1543, 8
          %s1545 = scalar_lea.hbm %s2, %s1544
          %s1546 = sshll.u32 %s1536, 4
          %s1547 = int_to_ptr.vmem [resolvable:$true] %s1546
          %s1548 = sshll.u32 %s1545, 4
          %s1549 = int_to_ptr.hbm [resolvable:$true] %s1548
          %1554 = dma.vmem_to_hbm [thread:$0]  %s1547, 1024, %s1549, %s1533, 128, 128, 8
        $region32: #{tpu_custom_call.1} parent=27 // pred_fallthru
          _
      $region28: #{tpu_custom_call.1} parent=5 // pred_fallthru
        _
      %p1555 = scmp.le.s32.totalorder 2, %s11
      // Predicated region
      $region33: #{tpu_custom_call.1} parent=5 // pred_check
        %p1556 = pneg %p1555
      $region34: #{tpu_custom_call.1} parent=5 // pred_check_branch
        %1558 = sbr.rel (%p1556) target = $region36
      $region35: #{tpu_custom_call.1} parent=5 // pred_region
        %s1559 = ssub.s32 %s11, 2
        // Predicated region
        $region37: #{tpu_custom_call.1} parent=35 // pred_check
          %p1560 = pneg %p92
        $region38: #{tpu_custom_call.1} parent=35 // pred_check_branch
          %1562 = sbr.rel (%p1560) target = $region40
        $region39: #{tpu_custom_call.1} parent=35 // pred_region
          %s1563 = sand.u32 %s77, 1
          %s1564 = scalar_lea.sflag [#allocation3], %s1563
          %s1565 = sand.u32 %s77, 1
          %s1566 = smul.addr %s1565, 64
          %s1567 = scalar_lea.vmem [#allocation2], %s1566
          %1569 = dma.done %s1564, 1024
        $region40: #{tpu_custom_call.1} parent=35 // pred_fallthru
          _
      $region36: #{tpu_custom_call.1} parent=5 // pred_fallthru
        _
    $region6: #{tpu_custom_call.1} parent=1 // loop_footer
      %s15 = sadd.s32 1, %s11
    $region7: #{tpu_custom_call.1} parent=1 // loop_footer_branch
      %10 = sbr.rel target = $region3
    $region8: #{tpu_custom_call.1} parent=1 // loop_exit
      _
    %1570 = vsyncpa [#allocation3], 1
    %s1571 = scalar_lea.sflag [#allocation3], 1
    %1572 = vsyncpa %s1571, 1

</llo_original>
